<compile_context>
chip_gen: v7x
topology: tpu7x:2x2x1
jax: 0.10.0
libtpu: 0.0.40
codegen_flags: <defaults>
</compile_context>

<pallas_src>
import functools

import jax
import jax.numpy as jnp
from jax import lax
from jax.experimental import pallas as pl
from jax.experimental.pallas import tpu as pltpu

_EPS = 1e-12
_NEG_BIG = -1e30          # finite "-inf" for the running max (avoids inf math)
_MiB = 1024 * 1024


def _round_up(x, m):
    return ((x + m - 1) // m) * m


def _l2_normalize(x):
    # x * rsqrt(sum(x^2) + eps): rsqrt lowers to the EUP slot; eps guards
    # all-zero (padded) rows against NaN/Inf.
    return x * lax.rsqrt(jnp.sum(x * x, axis=-1, keepdims=True) + _EPS)


def _vmem_cap_bytes():
    """Usable per-core VMEM budget: ~80% of physical VMEM (128 MiB on
    v5e/v6e, 64 MiB on v7x), leaving headroom for Mosaic internal scratch and
    the pipelined x/out tiles.  Conservative fallback if the query fails."""
    try:
        phys = int(pltpu.get_tpu_info().vmem_capacity_bytes)
    except Exception:
        phys = 64 * _MiB            # safe on every generation
    return int(phys * 0.8)


# --------------------------------------------------------------------------
# Fused resident-bank path
# --------------------------------------------------------------------------
def _robust_aug_body(x, k_ref, v_ref, o_ref, *, alpha, inv_temp):
    """Shared fused math for one (tb, D) batch tile against a resident bank."""
    k = k_ref[...]                                   # (Mp, D) MXU-dtype bank
    q = _l2_normalize(x)                             # (tb, D) f32

    # Fold 1/temperature into q (tb*D mults) instead of scaling the (tb, Mp)
    # sim slab: removes a VPU + vld/vst pass over the largest intermediate.
    q_s = (q * inv_temp).astype(k.dtype)

    # cosine_sim / temperature, contracting the shared last (lane) dim.
    # A @ B^T maps onto the MXU's native transposed-RHS path (same pattern as
    # flash attention's q.k^T), so the resident key bank is never transposed
    # per grid step.
    s = lax.dot_general(q_s, k, (((1,), (1,)), ((), ())),
                        preferred_element_type=jnp.float32)   # (tb, Mp) f32

    # Un-normalized softmax numerator.  The denominator (and the zero-padded
    # memory columns) only scale each row uniformly and cancel under the L2
    # normalization of `retrieved` below, so neither is computed.
    e = jnp.exp(s - jnp.max(s, axis=-1, keepdims=True))        # (tb, Mp)

    r = jnp.dot(e.astype(v_ref.dtype), v_ref[...],
                preferred_element_type=jnp.float32)             # (tb, D) f32
    r = _l2_normalize(r)

    interp = (1.0 - alpha) * q + alpha * r
    o_ref[...] = _l2_normalize(interp).astype(o_ref.dtype)


def _fused_kernel_kv(x_ref, k_ref, v_ref, o_ref, *, alpha, inv_temp):
    _robust_aug_body(x_ref[...].astype(jnp.float32), k_ref, v_ref, o_ref,
                     alpha=alpha, inv_temp=inv_temp)


def _fused_kernel_k(x_ref, k_ref, o_ref, *, alpha, inv_temp):
    # value_mem is None: the key bank doubles as the value bank (one resident
    # VMEM copy, one HBM->VMEM DMA instead of two).
    _robust_aug_body(x_ref[...].astype(jnp.float32), k_ref, k_ref, o_ref,
                     alpha=alpha, inv_temp=inv_temp)


# --------------------------------------------------------------------------
# Memory-tiled online-softmax path (bank does not fit in VMEM)
# --------------------------------------------------------------------------
def _tiled_body(x_ref, k_ref, v_ref, o_ref, q_scr, m_scr, acc_scr,
                *, alpha, inv_temp):
    km = pl.program_id(1)

    @pl.when(km == 0)
    def _():
        q_scr[...] = _l2_normalize(x_ref[...].astype(jnp.float32))
        m_scr[...] = jnp.full(m_scr.shape, _NEG_BIG, jnp.float32)
        acc_scr[...] = jnp.zeros(acc_scr.shape, jnp.float32)

    k = k_ref[...]                                           # (bm, D)
    q_s = (q_scr[...] * inv_temp).astype(k.dtype)            # (tb, D)
    s = lax.dot_general(q_s, k, (((1,), (1,)), ((), ())),
                        preferred_element_type=jnp.float32)  # (tb, bm)

    m_prev = m_scr[...]
    m_new = jnp.maximum(m_prev, jnp.max(s, axis=-1, keepdims=True))
    p = jnp.exp(s - m_new)                                   # values in [0, 1]
    # Online accumulation of the softmax *numerator* only: the running sum `l`
    # of standard flash attention is unnecessary because `retrieved` is
    # L2-normalized, so the per-row 1/l scale cancels.
    acc_scr[...] = jnp.exp(m_prev - m_new) * acc_scr[...] + jnp.dot(
        p.astype(v_ref.dtype), v_ref[...], preferred_element_type=jnp.float32)
    m_scr[...] = m_new

    @pl.when(km == pl.num_programs(1) - 1)
    def _():
        q = q_scr[...]
        r = _l2_normalize(acc_scr[...])
        interp = (1.0 - alpha) * q + alpha * r
        o_ref[...] = _l2_normalize(interp).astype(o_ref.dtype)


def _tiled_kernel_kv(x_ref, k_ref, v_ref, o_ref, q_scr, m_scr, acc_scr,
                     *, alpha, inv_temp):
    _tiled_body(x_ref, k_ref, v_ref, o_ref, q_scr, m_scr, acc_scr,
                alpha=alpha, inv_temp=inv_temp)


def _tiled_kernel_k(x_ref, k_ref, o_ref, q_scr, m_scr, acc_scr,
                    *, alpha, inv_temp):
    _tiled_body(x_ref, k_ref, k_ref, o_ref, q_scr, m_scr, acc_scr,
                alpha=alpha, inv_temp=inv_temp)


# --------------------------------------------------------------------------
# alpha == 0 early-return path (normalize only)
# --------------------------------------------------------------------------
def _normalize_kernel(x_ref, o_ref):
    o_ref[...] = _l2_normalize(x_ref[...].astype(jnp.float32)).astype(o_ref.dtype)


# --------------------------------------------------------------------------
# Wrapper
# --------------------------------------------------------------------------
def robust_augmentation(x, key_mem, value_mem=None, *, alpha=0.3,
                        temperature=0.1, block_b=256, mxu_dtype=jnp.bfloat16,
                        memory_block_m=None):
    """Pallas implementation of RobustAugmentation.forward.

    x: (B, D); key_mem: (M, D); value_mem: (M, D) or None (keys reused).
    mxu_dtype: operand dtype fed to the MXU (accumulation is always f32);
      use jnp.float32 for tight parity with the reference.
    memory_block_m: force the memory-tiled (online-softmax) path with this
      memory tile; None selects the path automatically by VMEM fit.
    """
    B, D = x.shape
    M, Dk = key_mem.shape
    assert Dk == D
    share_bank = value_mem is None
    if not share_bank:
        assert value_mem.shape == (M, D)

    x_dtype = jnp.dtype(x.dtype)
    out_dtype = x_dtype
    x_isz = x_dtype.itemsize
    o_isz = jnp.dtype(out_dtype).itemsize
    vmem_cap = _vmem_cap_bytes()
    sub = 8 if x_dtype.itemsize >= 4 else 16          # sublane granularity

    # ---- alpha == 0: module early-returns the L2-normalized query ----------
    if alpha == 0.0:
        # Pure memory-bound elementwise work: large batch tiles (>=512 rows)
        # are needed to approach the HBM roofline; cap by VMEM.
        tb0 = min(1024, _round_up(B, sub))
        while tb0 > sub and 4 * tb0 * D * x_isz > vmem_cap // 4:
            tb0 = _round_up(tb0 // 2, sub)
        Bp = _round_up(B, tb0)
        xp = jnp.pad(x, ((0, Bp - B), (0, 0))) if Bp != B else x
        out = pl.pallas_call(
            _normalize_kernel,
            out_shape=jax.ShapeDtypeStruct((Bp, D), out_dtype),
            grid_spec=pltpu.PrefetchScalarGridSpec(
                num_scalar_prefetch=0, grid=(Bp // tb0,),
                in_specs=[pl.BlockSpec((tb0, D), lambda i: (i, 0))],
                out_specs=pl.BlockSpec((tb0, D), lambda i: (i, 0))),
            compiler_params=pltpu.CompilerParams(
                dimension_semantics=("parallel",),
                vmem_limit_bytes=min(vmem_cap,
                                     max(32 * _MiB, 8 * tb0 * D * x_isz))),
        )(xp)
        return out[:B]

    # ---- common prep ---------------------------------------------------------
    mxu_dtype = jnp.dtype(mxu_dtype)
    mxu_isz = mxu_dtype.itemsize
    inv_temp = 1.0 / float(temperature)
    n_banks = 1 if share_bank else 2

    keys = key_mem.astype(mxu_dtype)
    vals = None if share_bank else value_mem.astype(mxu_dtype)

    # batch tiling: big tiles, but keep the (parallel) batch grid at >= 2 steps
    # whenever the batch can be split so both v7x TensorCores get work.
    tb = min(block_b, _round_up(B, sub))
    if B > sub and (B + tb - 1) // tb < 2:
        tb = max(sub, _round_up((B + 1) // 2, sub))

    def fused_vmem(tb_, mp_, kv_bufs):
        return (2 * tb_ * D * x_isz                      # x tiles (dbl-buffered)
                + 2 * tb_ * D * o_isz                    # out tiles
                + kv_bufs * n_banks * mp_ * D * mxu_isz  # resident bank(s)
                + 4 * tb_ * mp_ * 4                      # sim/exp temporaries
                + 6 * tb_ * D * 4)                       # q/r/interp temporaries

    # Pad M to a multiple of 256: v6e/v7x MXUs are 256 wide; the zero-padded
    # rows are provably inert (see module docstring).  On v5e the extra <=128
    # padded columns are negligible.
    Mp_fused = _round_up(M, 256)
    use_fused = memory_block_m is None and fused_vmem(tb, Mp_fused, 1) <= vmem_cap
    if memory_block_m is None and not use_fused and tb > 128:
        # Shrink the batch tile (the f32 sim slab scales with tb*Mp) before
        # abandoning the resident-bank path -- matters first on v7x (64 MiB).
        if fused_vmem(128, Mp_fused, 1) <= vmem_cap:
            tb, use_fused = 128, True

    Bp = _round_up(B, tb)
    xp = jnp.pad(x, ((0, Bp - B), (0, 0))) if Bp != B else x
    grid_b = Bp // tb

    # ---- fused resident-bank path -------------------------------------------
    if use_fused:
        Mp = Mp_fused
        if Mp != M:
            keys = jnp.pad(keys, ((0, Mp - M), (0, 0)))
            if vals is not None:
                vals = jnp.pad(vals, ((0, Mp - M), (0, 0)))

        kernel = functools.partial(
            _fused_kernel_k if share_bank else _fused_kernel_kv,
            alpha=float(alpha), inv_temp=inv_temp)
        operands = (xp, keys) if share_bank else (xp, keys, vals)

        cost = pl.CostEstimate(
            flops=4 * Bp * Mp * D,
            transcendentals=Bp * Mp + 3 * Bp,
            bytes_accessed=Bp * D * (x_isz + o_isz) + n_banks * Mp * D * mxu_isz)

        def call_fused(single_buffer_bank):
            if single_buffer_bank:
                # Constant index_map => the bank never changes between grid
                # steps; single-buffering halves its VMEM footprint.
                bank_spec = pl.BlockSpec((Mp, D), lambda i: (0, 0),
                                         pipeline_mode=pl.Buffered(1))
                kv_bufs = 1
            else:
                bank_spec = pl.BlockSpec((Mp, D), lambda i: (0, 0))
                kv_bufs = 2
            in_specs = [pl.BlockSpec((tb, D), lambda i: (i, 0)), bank_spec]
            if not share_bank:
                in_specs = in_specs + [bank_spec]
            vmem_limit = min(vmem_cap,
                             max(32 * _MiB, int(1.25 * fused_vmem(tb, Mp, kv_bufs))))
            return pl.pallas_call(
                kernel,
                out_shape=jax.ShapeDtypeStruct((Bp, D), out_dtype),
                grid_spec=pltpu.PrefetchScalarGridSpec(
                    num_scalar_prefetch=0, grid=(grid_b,),
                    in_specs=in_specs,
                    out_specs=pl.BlockSpec((tb, D), lambda i: (i, 0))),
                compiler_params=pltpu.CompilerParams(
                    dimension_semantics=("parallel",),
                    vmem_limit_bytes=vmem_limit),
                cost_estimate=cost,
            )(*operands)

        try:
            out = call_fused(True)
        except Exception:
            # pl.Buffered(1) not accepted by this JAX/Mosaic version: fall back
            # to the default double-buffered resident spec (correct, 2x VMEM).
            out = call_fused(False)
        return out[:B]

    # ---- memory-tiled online-softmax path ------------------------------------
    def tiled_vmem(bm_):
        return (2 * tb * D * (x_isz + o_isz)
                + 2 * n_banks * bm_ * D * mxu_isz        # streamed k/v tiles
                + 4 * tb * bm_ * 4                       # sim/exp temporaries
                + (2 * tb * D + tb) * 4                  # q / m / acc scratch
                + 4 * tb * D * 4)

    if memory_block_m is not None:
        bm = max(128, _round_up(int(memory_block_m), 128))
    else:
        bm = 512
        while bm > 128 and tiled_vmem(bm) > vmem_cap:
            bm //= 2
        # TODO(synk): for extreme D where even bm=128 overflows VMEM, also
        # shrink tb here instead of relying on the compiler limit.

    Mp = _round_up(M, bm)
    if Mp != M:
        keys = jnp.pad(keys, ((0, Mp - M), (0, 0)))
        if vals is not None:
            vals = jnp.pad(vals, ((0, Mp - M), (0, 0)))
    grid_m = Mp // bm

    kernel = functools.partial(
        _tiled_kernel_k if share_bank else _tiled_kernel_kv,
        alpha=float(alpha), inv_temp=inv_temp)
    operands = (xp, keys) if share_bank else (xp, keys, vals)

    bank_spec = pl.BlockSpec((bm, D), lambda i, km: (km, 0))
    in_specs = [pl.BlockSpec((tb, D), lambda i, km: (i, 0)), bank_spec]
    if not share_bank:
        in_specs = in_specs + [bank_spec]

    cost = pl.CostEstimate(
        flops=4 * Bp * Mp * D,
        transcendentals=Bp * Mp + 3 * Bp,
        bytes_accessed=(Bp * D * (x_isz + o_isz)
                        + grid_b * n_banks * Mp * D * mxu_isz))

    out = pl.pallas_call(
        kernel,
        out_shape=jax.ShapeDtypeStruct((Bp, D), out_dtype),
        grid_spec=pltpu.PrefetchScalarGridSpec(
            num_scalar_prefetch=0, grid=(grid_b, grid_m),
            in_specs=in_specs,
            out_specs=pl.BlockSpec((tb, D), lambda i, km: (i, 0)),
            scratch_shapes=[pltpu.VMEM((tb, D), jnp.float32),    # q
                            pltpu.VMEM((tb, 1), jnp.float32),    # running max
                            pltpu.VMEM((tb, D), jnp.float32)]),  # acc numerator
        compiler_params=pltpu.CompilerParams(
            dimension_semantics=("parallel", "arbitrary"),
            vmem_limit_bytes=min(vmem_cap,
                                 max(32 * _MiB, int(1.25 * tiled_vmem(bm))))),
        cost_estimate=cost,
    )(*operands)
    return out[:B]


def robust_augmentation_ref(x, key_mem, value_mem, alpha, temperature):
    """Pure-JAX reference mirroring the PyTorch forward."""
    x = x.astype(jnp.float32)
    q = x / jnp.linalg.norm(x, axis=-1, keepdims=True)
    if alpha == 0.0:
        return q
    keys = key_mem.astype(jnp.float32)
    sim = q @ keys.T
    w = jax.nn.softmax(sim / temperature, axis=-1)
    vals = keys if value_mem is None else value_mem.astype(jnp.float32)
    r = w @ vals
    r = r / jnp.linalg.norm(r, axis=-1, keepdims=True)
    interp = (1.0 - alpha) * q + alpha * r
    return interp / jnp.linalg.norm(interp, axis=-1, keepdims=True)


if __name__ == "__main__":
    alpha, temperature = 0.3, 0.1
    B, D, M = 48, 128, 300      # batch, embedding dim, memory slots

    key = jax.random.PRNGKey(0)
    kx, kk, kv = jax.random.split(key, 3)
    x = jax.random.normal(kx, (B, D), dtype=jnp.float32)
    key_mem = jax.random.normal(kk, (M, D), dtype=jnp.float32)
    value_mem = jax.random.normal(kv, (M, D), dtype=jnp.float32)

    ref_kv = robust_augmentation_ref(x, key_mem, value_mem, alpha, temperature)
    ref_k = robust_augmentation_ref(x, key_mem, None, alpha, temperature)

    # 1) fused resident-bank path, f32 MXU operands: tight check.
    out = jax.block_until_ready(robust_augmentation(
        x, key_mem, value_mem, alpha=alpha, temperature=temperature,
        mxu_dtype=jnp.float32))
    assert out.shape == (B, D)
    assert jnp.allclose(out, ref_kv, atol=2e-4, rtol=2e-4), "fused f32 mismatch"

    # 2) fused path with the key bank reused as values (single resident bank),
    #    default bf16 MXU operands: loose sanity check.
    out = jax.block_until_ready(robust_augmentation(
        x, key_mem, None, alpha=alpha, temperature=temperature))
    assert jnp.allclose(out, ref_k, atol=5e-2, rtol=5e-2), "fused bf16 mismatch"
    assert jnp.allclose(jnp.linalg.norm(out, axis=-1), 1.0, atol=1e-2)

    # 3) forced memory-tiled (online-softmax) path, 3 memory tiles, f32 MXU.
    out = jax.block_until_ready(robust_augmentation(
        x, key_mem, value_mem, alpha=alpha, temperature=temperature,
        mxu_dtype=jnp.float32, memory_block_m=128))
    assert jnp.allclose(out, ref_kv, atol=2e-4, rtol=2e-4), "tiled path mismatch"

    # 4) alpha == 0 early-return (normalize-only) path.
    out0 = jax.block_until_ready(robust_augmentation(
        x, key_mem, value_mem, alpha=0.0, temperature=temperature))
    ref0 = x / jnp.linalg.norm(x, axis=-1, keepdims=True)
    assert jnp.allclose(out0, ref0, atol=1e-5, rtol=1e-5), "alpha=0 mismatch"

    print("KERNEL_OK")
</pallas_src>

<mosaic_0001>
module attributes {stable_mosaic.version = 11 : i64} {
  func.func @_fused_kernel_kv(%arg0: i32, %arg1: memref<24x128xf32, #tpu.memory_space<vmem>>, %arg2: memref<512x128xf32, #tpu.memory_space<vmem>>, %arg3: memref<512x128xf32, #tpu.memory_space<vmem>>, %arg4: memref<24x128xf32, #tpu.memory_space<vmem>>) attributes {dimension_semantics = [#tpu.dimension_semantics<parallel>], iteration_bounds = array<i64: 2>, scalar_prefetch = 0 : i64, scratch_operands = 0 : i64, tpu.core_type = #tpu.core_type<tc>, window_params = [{transform_indices = @transform_0, window_bounds = array<i64: 24, 128>}, {pipeline_mode = #tpu.pipeline_mode<synchronous>, transform_indices = @transform_1, window_bounds = array<i64: 512, 128>}, {pipeline_mode = #tpu.pipeline_mode<synchronous>, transform_indices = @transform_2, window_bounds = array<i64: 512, 128>}, {transform_indices = @transform_3, window_bounds = array<i64: 24, 128>}]} {
    %c0 = arith.constant 0 : index
    %c0_0 = arith.constant 0 : index
    %0 = vector.load %arg1[%c0, %c0_0] : memref<24x128xf32, #tpu.memory_space<vmem>>, vector<24x128xf32>
    %c0_1 = arith.constant 0 : index
    %c0_2 = arith.constant 0 : index
    %1 = vector.load %arg2[%c0_1, %c0_2] : memref<512x128xf32, #tpu.memory_space<vmem>>, vector<512x128xf32>
    %2 = arith.mulf %0, %0 : vector<24x128xf32>
    %cst = arith.constant dense<0.000000e+00> : vector<24xf32>
    %3 = vector.multi_reduction <add>, %2, %cst [1] : vector<24x128xf32> to vector<24xf32>
    %4 = vector.shape_cast %3 : vector<24xf32> to vector<24x1xf32>
    %cst_3 = arith.constant 9.99999996E-13 : f32
    %5 = vector.broadcast %cst_3 : f32 to vector<24x1xf32>
    %6 = arith.addf %4, %5 : vector<24x1xf32>
    %7 = math.rsqrt %6 : vector<24x1xf32>
    %8 = vector.broadcast %7 : vector<24x1xf32> to vector<24x128xf32>
    %9 = arith.mulf %0, %8 : vector<24x128xf32>
    %cst_4 = arith.constant 1.000000e+01 : f32
    %10 = vector.broadcast %cst_4 : f32 to vector<24x128xf32>
    %11 = arith.mulf %9, %10 : vector<24x128xf32>
    %cst_5 = arith.constant dense<0.000000e+00> : vector<24x512xf32>
    %12 = tpu.matmul %11, %1, %cst_5 {dimension_numbers = #tpu.dot_dimension_numbers<[1], [1], [0], [0], [0, 0, 1, 0], [], []>} : vector<24x128xf32>, vector<512x128xf32>, vector<24x512xf32> -> vector<24x512xf32>
    %cst_6 = arith.constant dense<0xFF800000> : vector<24xf32>
    %13 = vector.multi_reduction <maximumf>, %12, %cst_6 [1] : vector<24x512xf32> to vector<24xf32>
    %14 = vector.shape_cast %13 : vector<24xf32> to vector<24x1xf32>
    %15 = vector.broadcast %14 : vector<24x1xf32> to vector<24x512xf32>
    %16 = arith.subf %12, %15 : vector<24x512xf32>
    %17 = math.exp %16 : vector<24x512xf32>
    %c0_7 = arith.constant 0 : index
    %c0_8 = arith.constant 0 : index
    %18 = vector.load %arg3[%c0_7, %c0_8] : memref<512x128xf32, #tpu.memory_space<vmem>>, vector<512x128xf32>
    %cst_9 = arith.constant dense<0.000000e+00> : vector<24x128xf32>
    %19 = tpu.matmul %17, %18, %cst_9 {dimension_numbers = #tpu.dot_dimension_numbers<[1], [0], [0], [1], [0, 0, 1, 1], [], []>} : vector<24x512xf32>, vector<512x128xf32>, vector<24x128xf32> -> vector<24x128xf32>
    %20 = arith.mulf %19, %19 : vector<24x128xf32>
    %cst_10 = arith.constant dense<0.000000e+00> : vector<24xf32>
    %21 = vector.multi_reduction <add>, %20, %cst_10 [1] : vector<24x128xf32> to vector<24xf32>
    %22 = vector.shape_cast %21 : vector<24xf32> to vector<24x1xf32>
    %cst_11 = arith.constant 9.99999996E-13 : f32
    %23 = vector.broadcast %cst_11 : f32 to vector<24x1xf32>
    %24 = arith.addf %22, %23 : vector<24x1xf32>
    %25 = math.rsqrt %24 : vector<24x1xf32>
    %26 = vector.broadcast %25 : vector<24x1xf32> to vector<24x128xf32>
    %27 = arith.mulf %19, %26 : vector<24x128xf32>
    %cst_12 = arith.constant 0.699999988 : f32
    %28 = vector.broadcast %cst_12 : f32 to vector<24x128xf32>
    %29 = arith.mulf %28, %9 : vector<24x128xf32>
    %cst_13 = arith.constant 3.000000e-01 : f32
    %30 = vector.broadcast %cst_13 : f32 to vector<24x128xf32>
    %31 = arith.mulf %30, %27 : vector<24x128xf32>
    %32 = arith.addf %29, %31 : vector<24x128xf32>
    %33 = arith.mulf %32, %32 : vector<24x128xf32>
    %cst_14 = arith.constant dense<0.000000e+00> : vector<24xf32>
    %34 = vector.multi_reduction <add>, %33, %cst_14 [1] : vector<24x128xf32> to vector<24xf32>
    %35 = vector.shape_cast %34 : vector<24xf32> to vector<24x1xf32>
    %cst_15 = arith.constant 9.99999996E-13 : f32
    %36 = vector.broadcast %cst_15 : f32 to vector<24x1xf32>
    %37 = arith.addf %35, %36 : vector<24x1xf32>
    %38 = math.rsqrt %37 : vector<24x1xf32>
    %39 = vector.broadcast %38 : vector<24x1xf32> to vector<24x128xf32>
    %40 = arith.mulf %32, %39 : vector<24x128xf32>
    %c0_16 = arith.constant 0 : index
    %c0_17 = arith.constant 0 : index
    %41 = vector.load %arg4[%c0_16, %c0_17] : memref<24x128xf32, #tpu.memory_space<vmem>>, vector<24x128xf32>
    tpu.vector_store %arg4[%c0_16, %c0_17], %40 {strides = array<i32>} : memref<24x128xf32, #tpu.memory_space<vmem>>, vector<24x128xf32>,
    return
  }
  func.func @transform_0(%arg0: i32) -> (i32, i32) {
    %c0_i32 = arith.constant 0 : i32
    %c0_i32_0 = arith.constant 0 : i32
    return %arg0, %c0_i32 : i32, i32
  }
  func.func @transform_1(%arg0: i32) -> (i32, i32) {
    %c0_i32 = arith.constant 0 : i32
    %c0_i32_0 = arith.constant 0 : i32
    %c0_i32_1 = arith.constant 0 : i32
    return %c0_i32, %c0_i32_0 : i32, i32
  }
  func.func @transform_2(%arg0: i32) -> (i32, i32) {
    %c0_i32 = arith.constant 0 : i32
    %c0_i32_0 = arith.constant 0 : i32
    %c0_i32_1 = arith.constant 0 : i32
    return %c0_i32, %c0_i32_0 : i32, i32
  }
  func.func @transform_3(%arg0: i32) -> (i32, i32) {
    %c0_i32 = arith.constant 0 : i32
    %c0_i32_0 = arith.constant 0 : i32
    return %arg0, %c0_i32 : i32, i32
  }
}

module attributes {stable_mosaic.version = 11 : i64} {
  func.func @_fused_kernel_kv(%arg0: i32, %arg1: memref<24x128xf32, #tpu.memory_space<vmem>>, %arg2: memref<512x128xf32, #tpu.memory_space<vmem>>, %arg3: memref<512x128xf32, #tpu.memory_space<vmem>>, %arg4: memref<24x128xf32, #tpu.memory_space<vmem>>) attributes {dimension_semantics = [#tpu.dimension_semantics<parallel>], iteration_bounds = array<i64: 2>, scalar_prefetch = 0 : i64, scratch_operands = 0 : i64, tpu.core_type = #tpu.core_type<tc>, window_params = [{transform_indices = @transform_0, window_bounds = array<i64: 24, 128>}, {pipeline_mode = #tpu.pipeline_mode<synchronous>, transform_indices = @transform_1, window_bounds = array<i64: 512, 128>}, {pipeline_mode = #tpu.pipeline_mode<synchronous>, transform_indices = @transform_2, window_bounds = array<i64: 512, 128>}, {transform_indices = @transform_3, window_bounds = array<i64: 24, 128>}]} {
    %c0 = arith.constant 0 : index
    %c0_0 = arith.constant 0 : index
    %0 = vector.load %arg1[%c0, %c0_0] : memref<24x128xf32, #tpu.memory_space<vmem>>, vector<24x128xf32>
    %c0_1 = arith.constant 0 : index
    %c0_2 = arith.constant 0 : index
    %1 = vector.load %arg2[%c0_1, %c0_2] : memref<512x128xf32, #tpu.memory_space<vmem>>, vector<512x128xf32>
    %2 = arith.mulf %0, %0 : vector<24x128xf32>
    %cst = arith.constant dense<0.000000e+00> : vector<24xf32>
    %3 = vector.multi_reduction <add>, %2, %cst [1] : vector<24x128xf32> to vector<24xf32>
    %4 = vector.shape_cast %3 : vector<24xf32> to vector<24x1xf32>
    %cst_3 = arith.constant 9.99999996E-13 : f32
    %5 = vector.broadcast %cst_3 : f32 to vector<24x1xf32>
    %6 = arith.addf %4, %5 : vector<24x1xf32>
    %7 = math.rsqrt %6 : vector<24x1xf32>
    %8 = vector.broadcast %7 : vector<24x1xf32> to vector<24x128xf32>
    %9 = arith.mulf %0, %8 : vector<24x128xf32>
    %cst_4 = arith.constant 1.000000e+01 : f32
    %10 = vector.broadcast %cst_4 : f32 to vector<24x128xf32>
    %11 = arith.mulf %9, %10 : vector<24x128xf32>
    %cst_5 = arith.constant dense<0.000000e+00> : vector<24x512xf32>
    %12 = tpu.matmul %11, %1, %cst_5 {dimension_numbers = #tpu.dot_dimension_numbers<[1], [1], [0], [0], [0, 0, 1, 0], [], []>} : vector<24x128xf32>, vector<512x128xf32>, vector<24x512xf32> -> vector<24x512xf32>
    %cst_6 = arith.constant dense<0xFF800000> : vector<24xf32>
    %13 = vector.multi_reduction <maximumf>, %12, %cst_6 [1] : vector<24x512xf32> to vector<24xf32>
    %14 = vector.shape_cast %13 : vector<24xf32> to vector<24x1xf32>
    %15 = vector.broadcast %14 : vector<24x1xf32> to vector<24x512xf32>
    %16 = arith.subf %12, %15 : vector<24x512xf32>
    %17 = math.exp %16 : vector<24x512xf32>
    %c0_7 = arith.constant 0 : index
    %c0_8 = arith.constant 0 : index
    %18 = vector.load %arg3[%c0_7, %c0_8] : memref<512x128xf32, #tpu.memory_space<vmem>>, vector<512x128xf32>
    %cst_9 = arith.constant dense<0.000000e+00> : vector<24x128xf32>
    %19 = tpu.matmul %17, %18, %cst_9 {dimension_numbers = #tpu.dot_dimension_numbers<[1], [0], [0], [1], [0, 0, 1, 1], [], []>} : vector<24x512xf32>, vector<512x128xf32>, vector<24x128xf32> -> vector<24x128xf32>
    %20 = arith.mulf %19, %19 : vector<24x128xf32>
    %cst_10 = arith.constant dense<0.000000e+00> : vector<24xf32>
    %21 = vector.multi_reduction <add>, %20, %cst_10 [1] : vector<24x128xf32> to vector<24xf32>
    %22 = vector.shape_cast %21 : vector<24xf32> to vector<24x1xf32>
    %cst_11 = arith.constant 9.99999996E-13 : f32
    %23 = vector.broadcast %cst_11 : f32 to vector<24x1xf32>
    %24 = arith.addf %22, %23 : vector<24x1xf32>
    %25 = math.rsqrt %24 : vector<24x1xf32>
    %26 = vector.broadcast %25 : vector<24x1xf32> to vector<24x128xf32>
    %27 = arith.mulf %19, %26 : vector<24x128xf32>
    %cst_12 = arith.constant 0.699999988 : f32
    %28 = vector.broadcast %cst_12 : f32 to vector<24x128xf32>
    %29 = arith.mulf %28, %9 : vector<24x128xf32>
    %cst_13 = arith.constant 3.000000e-01 : f32
    %30 = vector.broadcast %cst_13 : f32 to vector<24x128xf32>
    %31 = arith.mulf %30, %27 : vector<24x128xf32>
    %32 = arith.addf %29, %31 : vector<24x128xf32>
    %33 = arith.mulf %32, %32 : vector<24x128xf32>
    %cst_14 = arith.constant dense<0.000000e+00> : vector<24xf32>
    %34 = vector.multi_reduction <add>, %33, %cst_14 [1] : vector<24x128xf32> to vector<24xf32>
    %35 = vector.shape_cast %34 : vector<24xf32> to vector<24x1xf32>
    %cst_15 = arith.constant 9.99999996E-13 : f32
    %36 = vector.broadcast %cst_15 : f32 to vector<24x1xf32>
    %37 = arith.addf %35, %36 : vector<24x1xf32>
    %38 = math.rsqrt %37 : vector<24x1xf32>
    %39 = vector.broadcast %38 : vector<24x1xf32> to vector<24x128xf32>
    %40 = arith.mulf %32, %39 : vector<24x128xf32>
    %c0_16 = arith.constant 0 : index
    %c0_17 = arith.constant 0 : index
    %41 = vector.load %arg4[%c0_16, %c0_17] : memref<24x128xf32, #tpu.memory_space<vmem>>, vector<24x128xf32>
    tpu.vector_store %arg4[%c0_16, %c0_17], %40 {strides = array<i32>} : memref<24x128xf32, #tpu.memory_space<vmem>>, vector<24x128xf32>,
    return
  }
  func.func @transform_0(%arg0: i32) -> (i32, i32) {
    %c0_i32 = arith.constant 0 : i32
    %c0_i32_0 = arith.constant 0 : i32
    return %arg0, %c0_i32 : i32, i32
  }
  func.func @transform_1(%arg0: i32) -> (i32, i32) {
    %c0_i32 = arith.constant 0 : i32
    %c0_i32_0 = arith.constant 0 : i32
    %c0_i32_1 = arith.constant 0 : i32
    return %c0_i32, %c0_i32_0 : i32, i32
  }
  func.func @transform_2(%arg0: i32) -> (i32, i32) {
    %c0_i32 = arith.constant 0 : i32
    %c0_i32_0 = arith.constant 0 : i32
    %c0_i32_1 = arith.constant 0 : i32
    return %c0_i32, %c0_i32_0 : i32, i32
  }
  func.func @transform_3(%arg0: i32) -> (i32, i32) {
    %c0_i32 = arith.constant 0 : i32
    %c0_i32_0 = arith.constant 0 : i32
    return %arg0, %c0_i32 : i32, i32
  }
}

</mosaic_0001>

<llo_original>
// kernel: tpu_custom_call.1
$region0: #{tpu_custom_call.1}
  #allocation0 [shape = 'u32[]', space=smem, size = 0x4, offset = 0x4, fixed_abs, tag = 'smem constant byte address 0x4 - core index']
  #allocation1 [shape = 'u32[144,128]{1,0:T(1,128)}', space=vmem, size = 0x12000, scoped, tag = 'internal scratch']
  %s0 = inlined_call_operand.hbm [shape: f32[48,128], index: 0, kind: input, shape index: {}]
  %s1 = inlined_call_operand.hbm [shape: f32[512,128], index: 1, kind: input, shape index: {}]
  %s2 = inlined_call_operand.hbm [shape: f32[512,128], index: 2, kind: input, shape index: {}]
  %s3 = inlined_call_operand.hbm [shape: f32[48,128], index: 3, kind: output, shape index: {}]
  %s4 = sld [smem:[#allocation0]]
  $region57: #{tpu_custom_call.1} parent=0
    _
  %s6 = ssub.s32 1, %s4
  %s7 = scalar_select 0, %s6, %s4
  $region1: #{tpu_custom_call.1} parent=0
    #allocation2 [shape = 'u8[24576]{0}', space=vmem, size = 0x6000, scoped, tag = 'input window, operand 0']
    #allocation3 [shape = 's32[2]{0}', space=sflag, size = 0x8, scoped, tag = 'scoped memory for tpu_custom_call.1']
    #allocation4 [shape = 's32[2]{0}', space=sflag, size = 0x8, scoped, tag = 'scoped memory for tpu_custom_call.1']
    #allocation5 [shape = 'u8[262144]{0}', space=vmem, size = 0x40000, scoped, tag = 'input window, operand 1, single buffered']
    #allocation6 [shape = 's32[1]{0}', space=sflag, size = 0x4, scoped, tag = 'scoped memory for tpu_custom_call.1']
    #allocation7 [shape = 'u8[262144]{0}', space=vmem, size = 0x40000, scoped, tag = 'input window, operand 2, single buffered']
    #allocation8 [shape = 'u8[24576]{0}', space=vmem, size = 0x6000, scoped, tag = 'output window, operand 0']
    %8 = vsyncpa [#allocation3], 0
    %s9 = scalar_lea.sflag [#allocation3], 1
    %10 = vsyncpa %s9, 0
    %11 = vsyncpa [#allocation6], 0
    %12 = vsyncpa [#allocation4], 0
    %s13 = scalar_lea.sflag [#allocation4], 1
    %14 = vsyncpa %s13, 0
    loop: start=0, step=1, limit=4
    $region2: #{tpu_custom_call.1} parent=1 // loop_pre_header
      _
    $region3: #{tpu_custom_call.1} parent=1 // loop_header
      %s16 = sphi 0, %s20
      %p17 = scmp.ge.s32.totalorder %s16, 4
      %s26 = sphi 0, %s28
      %s29 = sphi 0, %s26
      %s30 = sphi 0, %s29
      %s46 = sphi 0, %s30
      %s50 = sphi 0, %s50
      %s52 = sphi 0, %s50
      %s53 = sphi 0, %s52
      %s67 = sphi 0, %s53
      %s71 = sphi 0, %s71
      %s73 = sphi 0, %s71
      %s74 = sphi 0, %s73
      %s88 = sphi 0, %s74
      %s94 = sphi 0, %s96
      %s97 = sphi 0, %s94
      %s98 = sphi 0, %s97
      %s114 = sphi 0, %s98
    $region4: #{tpu_custom_call.1} parent=1 // loop_header_branch
      %19 = sbr.rel (%p17) target = $region8
    $region5: #{tpu_custom_call.1} parent=1 // loop_body
      %s21 = ssub.s32 %s16, 1
      %s22 = ssub.s32 %s16, 2
      %s23 = sadd.s32 %s16, 1
      %s24 = ssub.s32 %s16, %s23
      %p25 = scmp.eq.s32.totalorder %s24, 0
      %s27 = sadd.s32 %s26, 1
      %s28 = scalar_select %p25, %s26, %s27
      %p31 = pneg %p25
      %p32 = scmp.eq.s32.totalorder %s16, 1
      %p33 = por %p31, %p32
      %p34 = scmp.ne.s32.totalorder %s26, %s29
      %p35 = scmp.eq.s32.totalorder %s16, 0
      %p36 = por %p34, %p35
      %p37 = scmp.ne.s32.totalorder %s26, %s29
      %p38 = scmp.eq.s32.totalorder %s21, 1
      %p39 = por %p37, %p38
      %p40 = scmp.ne.s32.totalorder %s29, %s30
      %p41 = scmp.eq.s32.totalorder %s21, 0
      %p42 = por %p40, %p41
      %p43 = scmp.ne.s32.totalorder %s29, %s30
      %p44 = scmp.eq.s32.totalorder %s22, 1
      %p45 = por %p43, %p44
      %p47 = scmp.ne.s32.totalorder %s30, %s46
      %p48 = scmp.eq.s32.totalorder %s22, 0
      %p49 = por %p47, %p48
      %s51 = sadd.s32 %s50, 1
      %p54 = scmp.eq.s32.totalorder %s16, 1
      %p55 = scmp.ne.s32.totalorder %s50, %s52
      %p56 = scmp.eq.s32.totalorder %s16, 0
      %p57 = por %p55, %p56
      %p58 = scmp.ne.s32.totalorder %s50, %s52
      %p59 = scmp.eq.s32.totalorder %s21, 1
      %p60 = por %p58, %p59
      %p61 = scmp.ne.s32.totalorder %s52, %s53
      %p62 = scmp.eq.s32.totalorder %s21, 0
      %p63 = por %p61, %p62
      %p64 = scmp.ne.s32.totalorder %s52, %s53
      %p65 = scmp.eq.s32.totalorder %s22, 1
      %p66 = por %p64, %p65
      %p68 = scmp.ne.s32.totalorder %s53, %s67
      %p69 = scmp.eq.s32.totalorder %s22, 0
      %p70 = por %p68, %p69
      %s72 = sadd.s32 %s71, 1
      %p75 = scmp.eq.s32.totalorder %s16, 1
      %p76 = scmp.ne.s32.totalorder %s71, %s73
      %p77 = scmp.eq.s32.totalorder %s16, 0
      %p78 = por %p76, %p77
      %p79 = scmp.ne.s32.totalorder %s71, %s73
      %p80 = scmp.eq.s32.totalorder %s21, 1
      %p81 = por %p79, %p80
      %p82 = scmp.ne.s32.totalorder %s73, %s74
      %p83 = scmp.eq.s32.totalorder %s21, 0
      %p84 = por %p82, %p83
      %p85 = scmp.ne.s32.totalorder %s73, %s74
      %p86 = scmp.eq.s32.totalorder %s22, 1
      %p87 = por %p85, %p86
      %p89 = scmp.ne.s32.totalorder %s74, %s88
      %p90 = scmp.eq.s32.totalorder %s22, 0
      %p91 = por %p89, %p90
      %s92 = ssub.s32 %s16, %s23
      %p93 = scmp.eq.s32.totalorder %s92, 0
      %s95 = sadd.s32 %s94, 1
      %s96 = scalar_select %p93, %s94, %s95
      %p99 = pneg %p93
      %p100 = scmp.eq.s32.totalorder %s16, 1
      %p101 = por %p99, %p100
      %p102 = scmp.ne.s32.totalorder %s94, %s97
      %p103 = scmp.eq.s32.totalorder %s16, 0
      %p104 = por %p102, %p103
      %p105 = scmp.ne.s32.totalorder %s94, %s97
      %p106 = scmp.eq.s32.totalorder %s21, 1
      %p107 = por %p105, %p106
      %p108 = scmp.ne.s32.totalorder %s97, %s98
      %p109 = scmp.eq.s32.totalorder %s21, 0
      %p110 = por %p108, %p109
      %p111 = scmp.ne.s32.totalorder %s97, %s98
      %p112 = scmp.eq.s32.totalorder %s22, 1
      %p113 = por %p111, %p112
      %p115 = scmp.ne.s32.totalorder %s98, %s114
      %p116 = scmp.eq.s32.totalorder %s22, 0
      %p117 = por %p115, %p116
      %p118 = scmp.le.s32.totalorder 1, %s16
      %p119 = scmp.lt.s32.totalorder %s16, 3
      %p120 = pnand %p118, %p119
      %p121 = pneg %p120
      // Predicated region
      $region9: #{tpu_custom_call.1} parent=5 // pred_check
        _
      $region10: #{tpu_custom_call.1} parent=5 // pred_check_branch
        %123 = sbr.rel (%p120) target = $region12
      $region11: #{tpu_custom_call.1} parent=5 // pred_region
        %s124 = ssub.s32 %s16, 1
        // Predicated region
        $region13: #{tpu_custom_call.1} parent=11 // pred_check
          %p125 = pneg %p63
        $region14: #{tpu_custom_call.1} parent=11 // pred_check_branch
          %127 = sbr.rel (%p125) target = $region16
        $region15: #{tpu_custom_call.1} parent=11 // pred_region
          %s129 = ssub.s32 8192, 8192
          %130 = vsyncadd [#allocation6], %s129
          %s131 = sshll.u32 [#allocation5], 4
          %s132 = int_to_ptr.vmem [resolvable:$true] %s131
          %137 = dma.hbm_to_vmem [thread:$0]  %s1, 8192, %s132, [#allocation6], 128, 128, 8
        $region16: #{tpu_custom_call.1} parent=11 // pred_fallthru
          _
        // Predicated region
        $region17: #{tpu_custom_call.1} parent=11 // pred_check
          %p138 = pneg %p84
        $region18: #{tpu_custom_call.1} parent=11 // pred_check_branch
          %140 = sbr.rel (%p138) target = $region20
        $region19: #{tpu_custom_call.1} parent=11 // pred_region
          %s142 = ssub.s32 8192, 8192
          %143 = vsyncadd [#allocation6], %s142
          %s144 = sshll.u32 [#allocation7], 4
          %s145 = int_to_ptr.vmem [resolvable:$true] %s144
          %150 = dma.hbm_to_vmem [thread:$0]  %s2, 8192, %s145, [#allocation6], 128, 128, 8
        $region20: #{tpu_custom_call.1} parent=11 // pred_fallthru
          _
      $region12: #{tpu_custom_call.1} parent=5 // pred_fallthru
        _
      %p151 = scmp.lt.s32.totalorder %s16, 2
      // Predicated region
      $region21: #{tpu_custom_call.1} parent=5 // pred_check
        %p152 = pneg %p151
      $region22: #{tpu_custom_call.1} parent=5 // pred_check_branch
        %154 = sbr.rel (%p152) target = $region24
      $region23: #{tpu_custom_call.1} parent=5 // pred_region
        // Predicated region
        $region25: #{tpu_custom_call.1} parent=23 // pred_check
          %p155 = pneg %p36
        $region26: #{tpu_custom_call.1} parent=23 // pred_check_branch
          %157 = sbr.rel (%p155) target = $region28
        $region27: #{tpu_custom_call.1} parent=23 // pred_region
          %s158 = sand.u32 %s26, 1
          %s159 = scalar_lea.sflag [#allocation3], %s158
          %s160 = sand.u32 %s26, 1
          %s161 = smul.addr %s160, 24
          %s162 = scalar_lea.vmem [#allocation2], %s161
          %s163 = smul.u32 3, %s16
          %s165 = ssub.s32 384, 384
          %166 = vsyncadd %s159, %s165
          %s167 = smul.addr %s163, 128
          %s168 = scalar_lea.hbm %s0, %s167
          %s169 = sshll.u32 %s162, 4
          %s170 = int_to_ptr.vmem [resolvable:$true] %s169
          %175 = dma.hbm_to_vmem [thread:$0]  %s168, 384, %s170, %s159, 128, 128, 8
        $region28: #{tpu_custom_call.1} parent=23 // pred_fallthru
          _
      $region24: #{tpu_custom_call.1} parent=5 // pred_fallthru
        _
      %p176 = scmp.le.s32.totalorder 1, %s16
      %p177 = scmp.lt.s32.totalorder %s16, 3
      %p178 = pnand %p176, %p177
      %p179 = pneg %p178
      // Predicated region
      $region29: #{tpu_custom_call.1} parent=5 // pred_check
        _
      $region30: #{tpu_custom_call.1} parent=5 // pred_check_branch
        %181 = sbr.rel (%p178) target = $region32
      $region31: #{tpu_custom_call.1} parent=5 // pred_region
        %s182 = ssub.s32 %s16, 1
        %s183 = sand.u32 %s29, 1
        %s184 = scalar_lea.sflag [#allocation3], %s183
        %s185 = sand.u32 %s29, 1
        %s186 = smul.addr %s185, 24
        %s187 = scalar_lea.vmem [#allocation2], %s186
        // Predicated region
        $region33: #{tpu_custom_call.1} parent=31 // pred_check
          %p188 = pneg %p42
        $region34: #{tpu_custom_call.1} parent=31 // pred_check_branch
          %190 = sbr.rel (%p188) target = $region36
        $region35: #{tpu_custom_call.1} parent=31 // pred_region
          %191 = dma.done %s184, 384
        $region36: #{tpu_custom_call.1} parent=31 // pred_fallthru
          _
        // Predicated region
        $region37: #{tpu_custom_call.1} parent=31 // pred_check
          %p192 = pneg %p63
        $region38: #{tpu_custom_call.1} parent=31 // pred_check_branch
          %194 = sbr.rel (%p192) target = $region40
        $region39: #{tpu_custom_call.1} parent=31 // pred_region
          %195 = dma.done [#allocation6], 8192
        $region40: #{tpu_custom_call.1} parent=31 // pred_fallthru
          _
        // Predicated region
        $region41: #{tpu_custom_call.1} parent=31 // pred_check
          %p196 = pneg %p84
        $region42: #{tpu_custom_call.1} parent=31 // pred_check_branch
          %198 = sbr.rel (%p196) target = $region44
        $region43: #{tpu_custom_call.1} parent=31 // pred_region
          %199 = dma.done [#allocation6], 8192
        $region44: #{tpu_custom_call.1} parent=31 // pred_fallthru
          _
        %s200 = sand.u32 %s29, 1
        %s201 = scalar_lea.sflag [#allocation3], %s200
        %s202 = sand.u32 %s29, 1
        %s203 = smul.addr %s202, 24
        %s204 = scalar_lea.vmem [#allocation2], %s203
        %p205 = pneg %p42
        %p206 = pneg %p39
        %p207 = pneg %p63
        %p208 = pneg %p60
        %p209 = pneg %p84
        %p210 = pneg %p81
        %p211 = pneg %p110
        %p212 = pneg %p107
        %s213 = sand.u32 %s97, 1
        %s214 = scalar_lea.sflag [#allocation4], %s213
        %s215 = sand.u32 %s97, 1
        %s216 = smul.addr %s215, 24
        %s217 = scalar_lea.vmem [#allocation8], %s216
        %s218 = smul.u32 3, %s21
        %s219 = smul.u32 3, %s21
        %v220 = vld [vmem:[%s187] sm:$0xff]
        %v221 = vld [vmem:[%s187 + $0x8] sm:$0xff]
        %v222 = vld [vmem:[%s187 + $0x10] sm:$0xff]
        %v223 = vld [vmem:[#allocation5] sm:$0xff]
        %v224 = vld [vmem:[#allocation5 + $0x8] sm:$0xff]
        %v225 = vld [vmem:[#allocation5 + $0x10] sm:$0xff]
        %v226 = vld [vmem:[#allocation5 + $0x18] sm:$0xff]
        %v227 = vld [vmem:[#allocation5 + $0x20] sm:$0xff]
        %v228 = vld [vmem:[#allocation5 + $0x28] sm:$0xff]
        %v229 = vld [vmem:[#allocation5 + $0x30] sm:$0xff]
        %v230 = vld [vmem:[#allocation5 + $0x38] sm:$0xff]
        %v231 = vld [vmem:[#allocation5 + $0x40] sm:$0xff]
        %v232 = vld [vmem:[#allocation5 + $0x48] sm:$0xff]
        %v233 = vld [vmem:[#allocation5 + $0x50] sm:$0xff]
        %v234 = vld [vmem:[#allocation5 + $0x58] sm:$0xff]
        %v235 = vld [vmem:[#allocation5 + $0x60] sm:$0xff]
        %v236 = vld [vmem:[#allocation5 + $0x68] sm:$0xff]
        %v237 = vld [vmem:[#allocation5 + $0x70] sm:$0xff]
        %v238 = vld [vmem:[#allocation5 + $0x78] sm:$0xff]
        %v239 = vld [vmem:[#allocation5 + $0x80] sm:$0xff]
        %v240 = vld [vmem:[#allocation5 + $0x88] sm:$0xff]
        %v241 = vld [vmem:[#allocation5 + $0x90] sm:$0xff]
        %v242 = vld [vmem:[#allocation5 + $0x98] sm:$0xff]
        %v243 = vld [vmem:[#allocation5 + $0xa0] sm:$0xff]
        %v244 = vld [vmem:[#allocation5 + $0xa8] sm:$0xff]
        %v245 = vld [vmem:[#allocation5 + $0xb0] sm:$0xff]
        %v246 = vld [vmem:[#allocation5 + $0xb8] sm:$0xff]
        %v247 = vld [vmem:[#allocation5 + $0xc0] sm:$0xff]
        %v248 = vld [vmem:[#allocation5 + $0xc8] sm:$0xff]
        %v249 = vld [vmem:[#allocation5 + $0xd0] sm:$0xff]
        %v250 = vld [vmem:[#allocation5 + $0xd8] sm:$0xff]
        %v251 = vld [vmem:[#allocation5 + $0xe0] sm:$0xff]
        %v252 = vld [vmem:[#allocation5 + $0xe8] sm:$0xff]
        %v253 = vld [vmem:[#allocation5 + $0xf0] sm:$0xff]
        %v254 = vld [vmem:[#allocation5 + $0xf8] sm:$0xff]
        %v255 = vld [vmem:[#allocation5 + $0x100] sm:$0xff]
        %v256 = vld [vmem:[#allocation5 + $0x108] sm:$0xff]
        %v257 = vld [vmem:[#allocation5 + $0x110] sm:$0xff]
        %v258 = vld [vmem:[#allocation5 + $0x118] sm:$0xff]
        %v259 = vld [vmem:[#allocation5 + $0x120] sm:$0xff]
        %v260 = vld [vmem:[#allocation5 + $0x128] sm:$0xff]
        %v261 = vld [vmem:[#allocation5 + $0x130] sm:$0xff]
        %v262 = vld [vmem:[#allocation5 + $0x138] sm:$0xff]
        %v263 = vld [vmem:[#allocation5 + $0x140] sm:$0xff]
        %v264 = vld [vmem:[#allocation5 + $0x148] sm:$0xff]
        %v265 = vld [vmem:[#allocation5 + $0x150] sm:$0xff]
        %v266 = vld [vmem:[#allocation5 + $0x158] sm:$0xff]
        %v267 = vld [vmem:[#allocation5 + $0x160] sm:$0xff]
        %v268 = vld [vmem:[#allocation5 + $0x168] sm:$0xff]
        %v269 = vld [vmem:[#allocation5 + $0x170] sm:$0xff]
        %v270 = vld [vmem:[#allocation5 + $0x178] sm:$0xff]
        %v271 = vld [vmem:[#allocation5 + $0x180] sm:$0xff]
        %v272 = vld [vmem:[#allocation5 + $0x188] sm:$0xff]
        %v273 = vld [vmem:[#allocation5 + $0x190] sm:$0xff]
        %v274 = vld [vmem:[#allocation5 + $0x198] sm:$0xff]
        %v275 = vld [vmem:[#allocation5 + $0x1a0] sm:$0xff]
        %v276 = vld [vmem:[#allocation5 + $0x1a8] sm:$0xff]
        %v277 = vld [vmem:[#allocation5 + $0x1b0] sm:$0xff]
        %v278 = vld [vmem:[#allocation5 + $0x1b8] sm:$0xff]
        %v279 = vld [vmem:[#allocation5 + $0x1c0] sm:$0xff]
        %v280 = vld [vmem:[#allocation5 + $0x1c8] sm:$0xff]
        %v281 = vld [vmem:[#allocation5 + $0x1d0] sm:$0xff]
        %v282 = vld [vmem:[#allocation5 + $0x1d8] sm:$0xff]
        %v283 = vld [vmem:[#allocation5 + $0x1e0] sm:$0xff]
        %v284 = vld [vmem:[#allocation5 + $0x1e8] sm:$0xff]
        %v285 = vld [vmem:[#allocation5 + $0x1f0] sm:$0xff]
        %v286 = vld [vmem:[#allocation5 + $0x1f8] sm:$0xff]
        %v287 = vmul.f32 %v220, %v220
        %v288 = vmul.f32 %v221, %v221
        %v289 = vmul.f32 %v222, %v222
        %290 = vadd.xlane.f32.xlu0 %v287
        %v291 = vpop.xlane.xlu0 %290
        %292 = vadd.xlane.f32.xlu0 %v288
        %v293 = vpop.xlane.xlu0 %292
        %294 = vadd.xlane.f32.xlu0 %v289
        %v295 = vpop.xlane.xlu0 %294
        %v296 = vadd.f32 %v291, 1e-12
        %v297 = vadd.f32 %v293, 1e-12
        %v298 = vadd.f32 %v295, 1e-12
        %v299 = vrsqrt.pop %v296
        %v300 = vrsqrt.pop %v297
        %v301 = vrsqrt.pop %v298
        %v302 = vmul.f32 %v220, %v299
        %v303 = vmul.f32 %v221, %v300
        %v304 = vmul.f32 %v222, %v301
        %v305 = vmul.f32 %v302, 10.0
        %v306 = vmul.f32 %v303, 10.0
        %v307 = vmul.f32 %v304, 10.0
        %308 = vmatprep.subr.mxu0 0.0
        %309 = vmatpush1.xpose.msra.mxu0 %v223
        %310 = vmatprep.subr.mxu0 0.0
        %311 = vmatpush1.xpose.msra.mxu0 %v224
        %312 = vmatprep.subr.mxu0 0.0
        %313 = vmatpush1.xpose.msra.mxu0 %v225
        %314 = vmatprep.subr.mxu0 0.0
        %315 = vmatpush1.xpose.msra.mxu0 %v226
        %316 = vmatprep.subr.mxu0 0.0
        %317 = vmatpush1.xpose.msra.mxu0 %v227
        %318 = vmatprep.subr.mxu0 0.0
        %319 = vmatpush1.xpose.msra.mxu0 %v228
        %320 = vmatprep.subr.mxu0 0.0
        %321 = vmatpush1.xpose.msra.mxu0 %v229
        %322 = vmatprep.subr.mxu0 0.0
        %323 = vmatpush1.xpose.msra.mxu0 %v230
        %324 = vmatprep.subr.mxu0 0.0
        %325 = vmatpush1.xpose.msra.mxu0 %v231
        %326 = vmatprep.subr.mxu0 0.0
        %327 = vmatpush1.xpose.msra.mxu0 %v232
        %328 = vmatprep.subr.mxu0 0.0
        %329 = vmatpush1.xpose.msra.mxu0 %v233
        %330 = vmatprep.subr.mxu0 0.0
        %331 = vmatpush1.xpose.msra.mxu0 %v234
        %332 = vmatprep.subr.mxu0 0.0
        %333 = vmatpush1.xpose.msra.mxu0 %v235
        %334 = vmatprep.subr.mxu0 0.0
        %335 = vmatpush1.xpose.msra.mxu0 %v236
        %336 = vmatprep.subr.mxu0 0.0
        %337 = vmatpush1.xpose.msra.mxu0 %v237
        %338 = vmatprep.subr.mxu0 0.0
        %339 = vmatpush1.xpose.msra.mxu0 %v238
        %340 = vmatprep.subr.mxu0 0.0
        %341 = vmatpush1.xpose.msra.mxu0 %v239
        %342 = vmatprep.subr.mxu0 0.0
        %343 = vmatpush1.xpose.msra.mxu0 %v240
        %344 = vmatprep.subr.mxu0 0.0
        %345 = vmatpush1.xpose.msra.mxu0 %v241
        %346 = vmatprep.subr.mxu0 0.0
        %347 = vmatpush1.xpose.msra.mxu0 %v242
        %348 = vmatprep.subr.mxu0 0.0
        %349 = vmatpush1.xpose.msra.mxu0 %v243
        %350 = vmatprep.subr.mxu0 0.0
        %351 = vmatpush1.xpose.msra.mxu0 %v244
        %352 = vmatprep.subr.mxu0 0.0
        %353 = vmatpush1.xpose.msra.mxu0 %v245
        %354 = vmatprep.subr.mxu0 0.0
        %355 = vmatpush1.xpose.msra.mxu0 %v246
        %356 = vmatprep.subr.mxu0 0.0
        %357 = vmatpush1.xpose.msra.mxu0 %v247
        %358 = vmatprep.subr.mxu0 0.0
        %359 = vmatpush1.xpose.msra.mxu0 %v248
        %360 = vmatprep.subr.mxu0 0.0
        %361 = vmatpush1.xpose.msra.mxu0 %v249
        %362 = vmatprep.subr.mxu0 0.0
        %363 = vmatpush1.xpose.msra.mxu0 %v250
        %364 = vmatprep.subr.mxu0 0.0
        %365 = vmatpush1.xpose.msra.mxu0 %v251
        %366 = vmatprep.subr.mxu0 0.0
        %367 = vmatpush1.xpose.msra.mxu0 %v252
        %368 = vmatprep.subr.mxu0 0.0
        %369 = vmatpush1.xpose.msra.mxu0 %v253
        %370 = vmatprep.subr.mxu0 0.0
        %371 = vmatpush1.xpose.msra.mxu0 %v254
        %372 = vmatprep.mubr.f32.mxu0 0.0
        %373 = vmatmul.mubr.f32.gmra.mrb[0].mxu0 %v305
        %v374 = vpop.f32.mrb[0].mxu0
        %v375 = vadd.f32 0.0, %v374
        %v376 = vpop.f32.mrb[0].mxu0
        %v377 = vadd.f32 0.0, %v376
        %378 = vmatprep.mubr.f32.mxu0 0.0
        %379 = vmatmul.mubr.f32.gmra.mrb[0].mxu0 %v306
        %v380 = vpop.f32.mrb[0].mxu0
        %v381 = vadd.f32 0.0, %v380
        %v382 = vpop.f32.mrb[0].mxu0
        %v383 = vadd.f32 0.0, %v382
        %384 = vmatprep.mubr.f32.mxu0 0.0
        %385 = vmatmul.mubr.f32.gmra.mrb[0].mxu0 %v307
        %v386 = vpop.f32.mrb[0].mxu0
        %v387 = vadd.f32 0.0, %v386
        %v388 = vpop.f32.mrb[0].mxu0
        %v389 = vadd.f32 0.0, %v388
        %390 = vdwg.mxu0
        %391 = vmatprep.subr.mxu0 0.0
        %392 = vmatpush1.xpose.msra.mxu0 %v255
        %393 = vmatprep.subr.mxu0 0.0
        %394 = vmatpush1.xpose.msra.mxu0 %v256
        %395 = vmatprep.subr.mxu0 0.0
        %396 = vmatpush1.xpose.msra.mxu0 %v257
        %397 = vmatprep.subr.mxu0 0.0
        %398 = vmatpush1.xpose.msra.mxu0 %v258
        %399 = vmatprep.subr.mxu0 0.0
        %400 = vmatpush1.xpose.msra.mxu0 %v259
        %401 = vmatprep.subr.mxu0 0.0
        %402 = vmatpush1.xpose.msra.mxu0 %v260
        %403 = vmatprep.subr.mxu0 0.0
        %404 = vmatpush1.xpose.msra.mxu0 %v261
        %405 = vmatprep.subr.mxu0 0.0
        %406 = vmatpush1.xpose.msra.mxu0 %v262
        %407 = vmatprep.subr.mxu0 0.0
        %408 = vmatpush1.xpose.msra.mxu0 %v263
        %409 = vmatprep.subr.mxu0 0.0
        %410 = vmatpush1.xpose.msra.mxu0 %v264
        %411 = vmatprep.subr.mxu0 0.0
        %412 = vmatpush1.xpose.msra.mxu0 %v265
        %413 = vmatprep.subr.mxu0 0.0
        %414 = vmatpush1.xpose.msra.mxu0 %v266
        %415 = vmatprep.subr.mxu0 0.0
        %416 = vmatpush1.xpose.msra.mxu0 %v267
        %417 = vmatprep.subr.mxu0 0.0
        %418 = vmatpush1.xpose.msra.mxu0 %v268
        %419 = vmatprep.subr.mxu0 0.0
        %420 = vmatpush1.xpose.msra.mxu0 %v269
        %421 = vmatprep.subr.mxu0 0.0
        %422 = vmatpush1.xpose.msra.mxu0 %v270
        %423 = vmatprep.subr.mxu0 0.0
        %424 = vmatpush1.xpose.msra.mxu0 %v271
        %425 = vmatprep.subr.mxu0 0.0
        %426 = vmatpush1.xpose.msra.mxu0 %v272
        %427 = vmatprep.subr.mxu0 0.0
        %428 = vmatpush1.xpose.msra.mxu0 %v273
        %429 = vmatprep.subr.mxu0 0.0
        %430 = vmatpush1.xpose.msra.mxu0 %v274
        %431 = vmatprep.subr.mxu0 0.0
        %432 = vmatpush1.xpose.msra.mxu0 %v275
        %433 = vmatprep.subr.mxu0 0.0
        %434 = vmatpush1.xpose.msra.mxu0 %v276
        %435 = vmatprep.subr.mxu0 0.0
        %436 = vmatpush1.xpose.msra.mxu0 %v277
        %437 = vmatprep.subr.mxu0 0.0
        %438 = vmatpush1.xpose.msra.mxu0 %v278
        %439 = vmatprep.subr.mxu0 0.0
        %440 = vmatpush1.xpose.msra.mxu0 %v279
        %441 = vmatprep.subr.mxu0 0.0
        %442 = vmatpush1.xpose.msra.mxu0 %v280
        %443 = vmatprep.subr.mxu0 0.0
        %444 = vmatpush1.xpose.msra.mxu0 %v281
        %445 = vmatprep.subr.mxu0 0.0
        %446 = vmatpush1.xpose.msra.mxu0 %v282
        %447 = vmatprep.subr.mxu0 0.0
        %448 = vmatpush1.xpose.msra.mxu0 %v283
        %449 = vmatprep.subr.mxu0 0.0
        %450 = vmatpush1.xpose.msra.mxu0 %v284
        %451 = vmatprep.subr.mxu0 0.0
        %452 = vmatpush1.xpose.msra.mxu0 %v285
        %453 = vmatprep.subr.mxu0 0.0
        %454 = vmatpush1.xpose.msra.mxu0 %v286
        %455 = vmatprep.mubr.f32.mxu0 0.0
        %456 = vmatmul.mubr.f32.gmra.mrb[0].mxu0 %v305
        %v457 = vpop.f32.mrb[0].mxu0
        %v458 = vadd.f32 0.0, %v457
        %v459 = vpop.f32.mrb[0].mxu0
        %v460 = vadd.f32 0.0, %v459
        %461 = vmatprep.mubr.f32.mxu0 0.0
        %462 = vmatmul.mubr.f32.gmra.mrb[0].mxu0 %v306
        %v463 = vpop.f32.mrb[0].mxu0
        %v464 = vadd.f32 0.0, %v463
        %v465 = vpop.f32.mrb[0].mxu0
        %v466 = vadd.f32 0.0, %v465
        %467 = vmatprep.mubr.f32.mxu0 0.0
        %468 = vmatmul.mubr.f32.gmra.mrb[0].mxu0 %v307
        %v469 = vpop.f32.mrb[0].mxu0
        %v470 = vadd.f32 0.0, %v469
        %v471 = vpop.f32.mrb[0].mxu0
        %v472 = vadd.f32 0.0, %v471
        %473 = vdwg.mxu0
        %v474 = vmax.f32 %v375, %v458
        %v475 = vmax.f32 %v377, %v460
        %v476 = vmax.f32 %v474, %v475
        %477 = vmax.xlane.f32.xlu0 %v476
        %v478 = vpop.xlane.xlu0 %477
        %v479 = vmax.f32 %v381, %v464
        %v480 = vmax.f32 %v383, %v466
        %v481 = vmax.f32 %v479, %v480
        %482 = vmax.xlane.f32.xlu0 %v481
        %v483 = vpop.xlane.xlu0 %482
        %v484 = vmax.f32 %v387, %v470
        %v485 = vmax.f32 %v389, %v472
        %v486 = vmax.f32 %v484, %v485
        %487 = vmax.xlane.f32.xlu0 %v486
        %v488 = vpop.xlane.xlu0 %487
        %v489 = vsub.f32 %v375, %v478
        %v490 = vsub.f32 %v377, %v478
        %v491 = vsub.f32 %v458, %v478
        %v492 = vsub.f32 %v460, %v478
        %v493 = vsub.f32 %v381, %v483
        %v494 = vsub.f32 %v383, %v483
        %v495 = vsub.f32 %v464, %v483
        %v496 = vsub.f32 %v466, %v483
        %v497 = vsub.f32 %v387, %v488
        %v498 = vsub.f32 %v389, %v488
        %v499 = vsub.f32 %v470, %v488
        %v500 = vsub.f32 %v472, %v488
        %v501 = vmul.f32 %v489, 1.442695
        %v502 = vpow.pop %v501
        %v503 = vmul.f32 %v490, 1.442695
        %v504 = vpow.pop %v503
        %v505 = vmul.f32 %v491, 1.442695
        %v506 = vpow.pop %v505
        %v507 = vmul.f32 %v492, 1.442695
        %v508 = vpow.pop %v507
        %v509 = vmul.f32 %v493, 1.442695
        %v510 = vpow.pop %v509
        %v511 = vmul.f32 %v494, 1.442695
        %v512 = vpow.pop %v511
        %v513 = vmul.f32 %v495, 1.442695
        %v514 = vpow.pop %v513
        %v515 = vmul.f32 %v496, 1.442695
        %v516 = vpow.pop %v515
        %v517 = vmul.f32 %v497, 1.442695
        %v518 = vpow.pop %v517
        %v519 = vmul.f32 %v498, 1.442695
        %v520 = vpow.pop %v519
        %v521 = vmul.f32 %v499, 1.442695
        %v522 = vpow.pop %v521
        %v523 = vmul.f32 %v500, 1.442695
        %v524 = vpow.pop %v523
        %v525 = vld [vmem:[#allocation7] sm:$0xff]
        %v526 = vld [vmem:[#allocation7 + $0x8] sm:$0xff]
        %v527 = vld [vmem:[#allocation7 + $0x10] sm:$0xff]
        %v528 = vld [vmem:[#allocation7 + $0x18] sm:$0xff]
        %v529 = vld [vmem:[#allocation7 + $0x20] sm:$0xff]
        %v530 = vld [vmem:[#allocation7 + $0x28] sm:$0xff]
        %v531 = vld [vmem:[#allocation7 + $0x30] sm:$0xff]
        %v532 = vld [vmem:[#allocation7 + $0x38] sm:$0xff]
        %v533 = vld [vmem:[#allocation7 + $0x40] sm:$0xff]
        %v534 = vld [vmem:[#allocation7 + $0x48] sm:$0xff]
        %v535 = vld [vmem:[#allocation7 + $0x50] sm:$0xff]
        %v536 = vld [vmem:[#allocation7 + $0x58] sm:$0xff]
        %v537 = vld [vmem:[#allocation7 + $0x60] sm:$0xff]
        %v538 = vld [vmem:[#allocation7 + $0x68] sm:$0xff]
        %v539 = vld [vmem:[#allocation7 + $0x70] sm:$0xff]
        %v540 = vld [vmem:[#allocation7 + $0x78] sm:$0xff]
        %v541 = vld [vmem:[#allocation7 + $0x80] sm:$0xff]
        %v542 = vld [vmem:[#allocation7 + $0x88] sm:$0xff]
        %v543 = vld [vmem:[#allocation7 + $0x90] sm:$0xff]
        %v544 = vld [vmem:[#allocation7 + $0x98] sm:$0xff]
        %v545 = vld [vmem:[#allocation7 + $0xa0] sm:$0xff]
        %v546 = vld [vmem:[#allocation7 + $0xa8] sm:$0xff]
        %v547 = vld [vmem:[#allocation7 + $0xb0] sm:$0xff]
        %v548 = vld [vmem:[#allocation7 + $0xb8] sm:$0xff]
        %v549 = vld [vmem:[#allocation7 + $0xc0] sm:$0xff]
        %v550 = vld [vmem:[#allocation7 + $0xc8] sm:$0xff]
        %v551 = vld [vmem:[#allocation7 + $0xd0] sm:$0xff]
        %v552 = vld [vmem:[#allocation7 + $0xd8] sm:$0xff]
        %v553 = vld [vmem:[#allocation7 + $0xe0] sm:$0xff]
        %v554 = vld [vmem:[#allocation7 + $0xe8] sm:$0xff]
        %v555 = vld [vmem:[#allocation7 + $0xf0] sm:$0xff]
        %v556 = vld [vmem:[#allocation7 + $0xf8] sm:$0xff]
        %v557 = vld [vmem:[#allocation7 + $0x100] sm:$0xff]
        %v558 = vld [vmem:[#allocation7 + $0x108] sm:$0xff]
        %v559 = vld [vmem:[#allocation7 + $0x110] sm:$0xff]
        %v560 = vld [vmem:[#allocation7 + $0x118] sm:$0xff]
        %v561 = vld [vmem:[#allocation7 + $0x120] sm:$0xff]
        %v562 = vld [vmem:[#allocation7 + $0x128] sm:$0xff]
        %v563 = vld [vmem:[#allocation7 + $0x130] sm:$0xff]
        %v564 = vld [vmem:[#allocation7 + $0x138] sm:$0xff]
        %v565 = vld [vmem:[#allocation7 + $0x140] sm:$0xff]
        %v566 = vld [vmem:[#allocation7 + $0x148] sm:$0xff]
        %v567 = vld [vmem:[#allocation7 + $0x150] sm:$0xff]
        %v568 = vld [vmem:[#allocation7 + $0x158] sm:$0xff]
        %v569 = vld [vmem:[#allocation7 + $0x160] sm:$0xff]
        %v570 = vld [vmem:[#allocation7 + $0x168] sm:$0xff]
        %v571 = vld [vmem:[#allocation7 + $0x170] sm:$0xff]
        %v572 = vld [vmem:[#allocation7 + $0x178] sm:$0xff]
        %v573 = vld [vmem:[#allocation7 + $0x180] sm:$0xff]
        %v574 = vld [vmem:[#allocation7 + $0x188] sm:$0xff]
        %v575 = vld [vmem:[#allocation7 + $0x190] sm:$0xff]
        %v576 = vld [vmem:[#allocation7 + $0x198] sm:$0xff]
        %v577 = vld [vmem:[#allocation7 + $0x1a0] sm:$0xff]
        %v578 = vld [vmem:[#allocation7 + $0x1a8] sm:$0xff]
        %v579 = vld [vmem:[#allocation7 + $0x1b0] sm:$0xff]
        %v580 = vld [vmem:[#allocation7 + $0x1b8] sm:$0xff]
        %v581 = vld [vmem:[#allocation7 + $0x1c0] sm:$0xff]
        %v582 = vld [vmem:[#allocation7 + $0x1c8] sm:$0xff]
        %v583 = vld [vmem:[#allocation7 + $0x1d0] sm:$0xff]
        %v584 = vld [vmem:[#allocation7 + $0x1d8] sm:$0xff]
        %v585 = vld [vmem:[#allocation7 + $0x1e0] sm:$0xff]
        %v586 = vld [vmem:[#allocation7 + $0x1e8] sm:$0xff]
        %v587 = vld [vmem:[#allocation7 + $0x1f0] sm:$0xff]
        %v588 = vld [vmem:[#allocation7 + $0x1f8] sm:$0xff]
        %589 = vmatprep.subr.mxu0 0.0
        %590 = vmatpush1.msra.mxu0 %v525
        %591 = vmatprep.subr.mxu0 0.0
        %592 = vmatpush1.msra.mxu0 %v526
        %593 = vmatprep.subr.mxu0 0.0
        %594 = vmatpush1.msra.mxu0 %v527
        %595 = vmatprep.subr.mxu0 0.0
        %596 = vmatpush1.msra.mxu0 %v528
        %597 = vmatprep.subr.mxu0 0.0
        %598 = vmatpush1.msra.mxu0 %v529
        %599 = vmatprep.subr.mxu0 0.0
        %600 = vmatpush1.msra.mxu0 %v530
        %601 = vmatprep.subr.mxu0 0.0
        %602 = vmatpush1.msra.mxu0 %v531
        %603 = vmatprep.subr.mxu0 0.0
        %604 = vmatpush1.msra.mxu0 %v532
        %605 = vmatprep.subr.mxu0 0.0
        %606 = vmatpush1.msra.mxu0 %v533
        %607 = vmatprep.subr.mxu0 0.0
        %608 = vmatpush1.msra.mxu0 %v534
        %609 = vmatprep.subr.mxu0 0.0
        %610 = vmatpush1.msra.mxu0 %v535
        %611 = vmatprep.subr.mxu0 0.0
        %612 = vmatpush1.msra.mxu0 %v536
        %613 = vmatprep.subr.mxu0 0.0
        %614 = vmatpush1.msra.mxu0 %v537
        %615 = vmatprep.subr.mxu0 0.0
        %616 = vmatpush1.msra.mxu0 %v538
        %617 = vmatprep.subr.mxu0 0.0
        %618 = vmatpush1.msra.mxu0 %v539
        %619 = vmatprep.subr.mxu0 0.0
        %620 = vmatpush1.msra.mxu0 %v540
        %621 = vmatprep.subr.mxu0 0.0
        %622 = vmatpush1.msra.mxu0 %v541
        %623 = vmatprep.subr.mxu0 0.0
        %624 = vmatpush1.msra.mxu0 %v542
        %625 = vmatprep.subr.mxu0 0.0
        %626 = vmatpush1.msra.mxu0 %v543
        %627 = vmatprep.subr.mxu0 0.0
        %628 = vmatpush1.msra.mxu0 %v544
        %629 = vmatprep.subr.mxu0 0.0
        %630 = vmatpush1.msra.mxu0 %v545
        %631 = vmatprep.subr.mxu0 0.0
        %632 = vmatpush1.msra.mxu0 %v546
        %633 = vmatprep.subr.mxu0 0.0
        %634 = vmatpush1.msra.mxu0 %v547
        %635 = vmatprep.subr.mxu0 0.0
        %636 = vmatpush1.msra.mxu0 %v548
        %637 = vmatprep.subr.mxu0 0.0
        %638 = vmatpush1.msra.mxu0 %v549
        %639 = vmatprep.subr.mxu0 0.0
        %640 = vmatpush1.msra.mxu0 %v550
        %641 = vmatprep.subr.mxu0 0.0
        %642 = vmatpush1.msra.mxu0 %v551
        %643 = vmatprep.subr.mxu0 0.0
        %644 = vmatpush1.msra.mxu0 %v552
        %645 = vmatprep.subr.mxu0 0.0
        %646 = vmatpush1.msra.mxu0 %v553
        %647 = vmatprep.subr.mxu0 0.0
        %648 = vmatpush1.msra.mxu0 %v554
        %649 = vmatprep.subr.mxu0 0.0
        %650 = vmatpush1.msra.mxu0 %v555
        %651 = vmatprep.subr.mxu0 0.0
        %652 = vmatpush1.msra.mxu0 %v556
        %653 = vmatprep.mubr.f32.mxu0 %v504
        %654 = vmatmul.mubr.f32.gmra.mrb[0].mxu0 %v502
        %v655 = vpop.f32.mrb[0].mxu0
        %v656 = vadd.f32 0.0, %v655
        %v657 = vpop.f32.mrb[0].mxu0
        %658 = vmatprep.mubr.f32.mxu0 %v512
        %659 = vmatmul.mubr.f32.gmra.mrb[0].mxu0 %v510
        %v660 = vpop.f32.mrb[0].mxu0
        %v661 = vadd.f32 0.0, %v660
        %v662 = vpop.f32.mrb[0].mxu0
        %663 = vmatprep.mubr.f32.mxu0 %v520
        %664 = vmatmul.mubr.f32.gmra.mrb[0].mxu0 %v518
        %v665 = vpop.f32.mrb[0].mxu0
        %v666 = vadd.f32 0.0, %v665
        %v667 = vpop.f32.mrb[0].mxu0
        %668 = vdwg.mxu0
        %669 = vmatprep.subr.mxu0 0.0
        %670 = vmatpush1.msra.mxu0 %v557
        %671 = vmatprep.subr.mxu0 0.0
        %672 = vmatpush1.msra.mxu0 %v558
        %673 = vmatprep.subr.mxu0 0.0
        %674 = vmatpush1.msra.mxu0 %v559
        %675 = vmatprep.subr.mxu0 0.0
        %676 = vmatpush1.msra.mxu0 %v560
        %677 = vmatprep.subr.mxu0 0.0
        %678 = vmatpush1.msra.mxu0 %v561
        %679 = vmatprep.subr.mxu0 0.0
        %680 = vmatpush1.msra.mxu0 %v562
        %681 = vmatprep.subr.mxu0 0.0
        %682 = vmatpush1.msra.mxu0 %v563
        %683 = vmatprep.subr.mxu0 0.0
        %684 = vmatpush1.msra.mxu0 %v564
        %685 = vmatprep.subr.mxu0 0.0
        %686 = vmatpush1.msra.mxu0 %v565
        %687 = vmatprep.subr.mxu0 0.0
        %688 = vmatpush1.msra.mxu0 %v566
        %689 = vmatprep.subr.mxu0 0.0
        %690 = vmatpush1.msra.mxu0 %v567
        %691 = vmatprep.subr.mxu0 0.0
        %692 = vmatpush1.msra.mxu0 %v568
        %693 = vmatprep.subr.mxu0 0.0
        %694 = vmatpush1.msra.mxu0 %v569
        %695 = vmatprep.subr.mxu0 0.0
        %696 = vmatpush1.msra.mxu0 %v570
        %697 = vmatprep.subr.mxu0 0.0
        %698 = vmatpush1.msra.mxu0 %v571
        %699 = vmatprep.subr.mxu0 0.0
        %700 = vmatpush1.msra.mxu0 %v572
        %701 = vmatprep.subr.mxu0 0.0
        %702 = vmatpush1.msra.mxu0 %v573
        %703 = vmatprep.subr.mxu0 0.0
        %704 = vmatpush1.msra.mxu0 %v574
        %705 = vmatprep.subr.mxu0 0.0
        %706 = vmatpush1.msra.mxu0 %v575
        %707 = vmatprep.subr.mxu0 0.0
        %708 = vmatpush1.msra.mxu0 %v576
        %709 = vmatprep.subr.mxu0 0.0
        %710 = vmatpush1.msra.mxu0 %v577
        %711 = vmatprep.subr.mxu0 0.0
        %712 = vmatpush1.msra.mxu0 %v578
        %713 = vmatprep.subr.mxu0 0.0
        %714 = vmatpush1.msra.mxu0 %v579
        %715 = vmatprep.subr.mxu0 0.0
        %716 = vmatpush1.msra.mxu0 %v580
        %717 = vmatprep.subr.mxu0 0.0
        %718 = vmatpush1.msra.mxu0 %v581
        %719 = vmatprep.subr.mxu0 0.0
        %720 = vmatpush1.msra.mxu0 %v582
        %721 = vmatprep.subr.mxu0 0.0
        %722 = vmatpush1.msra.mxu0 %v583
        %723 = vmatprep.subr.mxu0 0.0
        %724 = vmatpush1.msra.mxu0 %v584
        %725 = vmatprep.subr.mxu0 0.0
        %726 = vmatpush1.msra.mxu0 %v585
        %727 = vmatprep.subr.mxu0 0.0
        %728 = vmatpush1.msra.mxu0 %v586
        %729 = vmatprep.subr.mxu0 0.0
        %730 = vmatpush1.msra.mxu0 %v587
        %731 = vmatprep.subr.mxu0 0.0
        %732 = vmatpush1.msra.mxu0 %v588
        %733 = vmatprep.mubr.f32.mxu0 %v508
        %734 = vmatmul.mubr.f32.gmra.mrb[0].mxu0 %v506
        %v735 = vpop.f32.mrb[0].mxu0
        %v736 = vadd.f32 %v656, %v735
        %v737 = vpop.f32.mrb[0].mxu0
        %738 = vmatprep.mubr.f32.mxu0 %v516
        %739 = vmatmul.mubr.f32.gmra.mrb[0].mxu0 %v514
        %v740 = vpop.f32.mrb[0].mxu0
        %v741 = vadd.f32 %v661, %v740
        %v742 = vpop.f32.mrb[0].mxu0
        %743 = vmatprep.mubr.f32.mxu0 %v524
        %744 = vmatmul.mubr.f32.gmra.mrb[0].mxu0 %v522
        %v745 = vpop.f32.mrb[0].mxu0
        %v746 = vadd.f32 %v666, %v745
        %v747 = vpop.f32.mrb[0].mxu0
        %748 = vdwg.mxu0
        %v749 = vmul.f32 %v736, %v736
        %v750 = vmul.f32 %v741, %v741
        %v751 = vmul.f32 %v746, %v746
        %752 = vadd.xlane.f32.xlu0 %v749
        %v753 = vpop.xlane.xlu0 %752
        %754 = vadd.xlane.f32.xlu0 %v750
        %v755 = vpop.xlane.xlu0 %754
        %756 = vadd.xlane.f32.xlu0 %v751
        %v757 = vpop.xlane.xlu0 %756
        %v758 = vadd.f32 %v753, 1e-12
        %v759 = vadd.f32 %v755, 1e-12
        %v760 = vadd.f32 %v757, 1e-12
        %v761 = vrsqrt.pop %v758
        %v762 = vrsqrt.pop %v759
        %v763 = vrsqrt.pop %v760
        %v764 = vmul.f32 %v736, %v761
        %v765 = vmul.f32 %v741, %v762
        %v766 = vmul.f32 %v746, %v763
        %v767 = vmul.f32 %v302, 0.7
        %v768 = vmul.f32 %v303, 0.7
        %v769 = vmul.f32 %v304, 0.7
        %v770 = vmul.f32 %v764, 0.3
        %v771 = vmul.f32 %v765, 0.3
        %v772 = vmul.f32 %v766, 0.3
        %v773 = vadd.f32 %v767, %v770
        %v774 = vadd.f32 %v768, %v771
        %v775 = vadd.f32 %v769, %v772
        %v776 = vmul.f32 %v773, %v773
        %v777 = vmul.f32 %v774, %v774
        %v778 = vmul.f32 %v775, %v775
        %779 = vadd.xlane.f32.xlu0 %v776
        %v780 = vpop.xlane.xlu0 %779
        %781 = vadd.xlane.f32.xlu0 %v777
        %v782 = vpop.xlane.xlu0 %781
        %783 = vadd.xlane.f32.xlu0 %v778
        %v784 = vpop.xlane.xlu0 %783
        %v785 = vadd.f32 %v780, 1e-12
        %v786 = vadd.f32 %v782, 1e-12
        %v787 = vadd.f32 %v784, 1e-12
        %v788 = vrsqrt.pop %v785
        %v789 = vrsqrt.pop %v786
        %v790 = vrsqrt.pop %v787
        %v791 = vmul.f32 %v773, %v788
        %v792 = vmul.f32 %v774, %v789
        %v793 = vmul.f32 %v775, %v790
        %794 = vst [vmem:[%s217] sm:$0xff] %v791
        %795 = vst [vmem:[%s217 + $0x8] sm:$0xff] %v792
        %796 = vst [vmem:[%s217 + $0x10] sm:$0xff] %v793
        %s797 = sand.u32 %s97, 1
        %s798 = scalar_lea.sflag [#allocation4], %s797
        %s799 = sand.u32 %s97, 1
        %s800 = smul.addr %s799, 24
        %s801 = scalar_lea.vmem [#allocation8], %s800
        // Predicated region
        $region45: #{tpu_custom_call.1} parent=31 // pred_check
          %p802 = pneg %p107
        $region46: #{tpu_custom_call.1} parent=31 // pred_check_branch
          %804 = sbr.rel (%p802) target = $region48
        $region47: #{tpu_custom_call.1} parent=31 // pred_region
          %s805 = smul.u32 3, %s21
          %s807 = ssub.s32 384, 384
          %808 = vsyncadd %s798, %s807
          %s809 = smul.addr %s805, 128
          %s810 = scalar_lea.hbm %s3, %s809
          %s811 = sshll.u32 %s801, 4
          %s812 = int_to_ptr.vmem [resolvable:$true] %s811
          %817 = dma.vmem_to_hbm [thread:$0]  %s812, 384, %s810, %s798, 128, 128, 8
        $region48: #{tpu_custom_call.1} parent=31 // pred_fallthru
          _
      $region32: #{tpu_custom_call.1} parent=5 // pred_fallthru
        _
      %p818 = scmp.le.s32.totalorder 2, %s16
      // Predicated region
      $region49: #{tpu_custom_call.1} parent=5 // pred_check
        %p819 = pneg %p818
      $region50: #{tpu_custom_call.1} parent=5 // pred_check_branch
        %821 = sbr.rel (%p819) target = $region52
      $region51: #{tpu_custom_call.1} parent=5 // pred_region
        %s822 = ssub.s32 %s16, 2
        // Predicated region
        $region53: #{tpu_custom_call.1} parent=51 // pred_check
          %p823 = pneg %p113
        $region54: #{tpu_custom_call.1} parent=51 // pred_check_branch
          %825 = sbr.rel (%p823) target = $region56
        $region55: #{tpu_custom_call.1} parent=51 // pred_region
          %s826 = sand.u32 %s98, 1
          %s827 = scalar_lea.sflag [#allocation4], %s826
          %s828 = sand.u32 %s98, 1
          %s829 = smul.addr %s828, 24
          %s830 = scalar_lea.vmem [#allocation8], %s829
          %831 = dma.done %s827, 384
        $region56: #{tpu_custom_call.1} parent=51 // pred_fallthru
          _
      $region52: #{tpu_custom_call.1} parent=5 // pred_fallthru
        _
    $region6: #{tpu_custom_call.1} parent=1 // loop_footer
      %s20 = sadd.s32 1, %s16
    $region7: #{tpu_custom_call.1} parent=1 // loop_footer_branch
      %15 = sbr.rel target = $region3
    $region8: #{tpu_custom_call.1} parent=1 // loop_exit
      _
    %832 = vsyncpa [#allocation3], 1
    %s833 = scalar_lea.sflag [#allocation3], 1
    %834 = vsyncpa %s833, 1
    %835 = vsyncpa [#allocation6], 1
    %836 = vsyncpa [#allocation4], 1
    %s837 = scalar_lea.sflag [#allocation4], 1
    %838 = vsyncpa %s837, 1

// kernel: tpu_custom_call.1
$region0: #{tpu_custom_call.1}
  #allocation0 [shape = 'u32[]', space=smem, size = 0x4, offset = 0x4, fixed_abs, tag = 'smem constant byte address 0x4 - core index']
  #allocation1 [shape = 'u32[144,128]{1,0:T(1,128)}', space=vmem, size = 0x12000, scoped, tag = 'internal scratch']
  %s0 = inlined_call_operand.hbm [shape: f32[48,128], index: 0, kind: input, shape index: {}]
  %s1 = inlined_call_operand.hbm [shape: f32[512,128], index: 1, kind: input, shape index: {}]
  %s2 = inlined_call_operand.hbm [shape: f32[512,128], index: 2, kind: input, shape index: {}]
  %s3 = inlined_call_operand.hbm [shape: f32[48,128], index: 3, kind: output, shape index: {}]
  %s4 = sld [smem:[#allocation0]]
  $region57: #{tpu_custom_call.1} parent=0
    _
  %s6 = ssub.s32 1, %s4
  %s7 = scalar_select 0, %s6, %s4
  $region1: #{tpu_custom_call.1} parent=0
    #allocation2 [shape = 'u8[24576]{0}', space=vmem, size = 0x6000, scoped, tag = 'input window, operand 0']
    #allocation3 [shape = 's32[2]{0}', space=sflag, size = 0x8, scoped, tag = 'scoped memory for tpu_custom_call.1']
    #allocation4 [shape = 's32[2]{0}', space=sflag, size = 0x8, scoped, tag = 'scoped memory for tpu_custom_call.1']
    #allocation5 [shape = 'u8[262144]{0}', space=vmem, size = 0x40000, scoped, tag = 'input window, operand 1, single buffered']
    #allocation6 [shape = 's32[1]{0}', space=sflag, size = 0x4, scoped, tag = 'scoped memory for tpu_custom_call.1']
    #allocation7 [shape = 'u8[262144]{0}', space=vmem, size = 0x40000, scoped, tag = 'input window, operand 2, single buffered']
    #allocation8 [shape = 'u8[24576]{0}', space=vmem, size = 0x6000, scoped, tag = 'output window, operand 0']
    %8 = vsyncpa [#allocation3], 0
    %s9 = scalar_lea.sflag [#allocation3], 1
    %10 = vsyncpa %s9, 0
    %11 = vsyncpa [#allocation6], 0
    %12 = vsyncpa [#allocation4], 0
    %s13 = scalar_lea.sflag [#allocation4], 1
    %14 = vsyncpa %s13, 0
    loop: start=0, step=1, limit=4
    $region2: #{tpu_custom_call.1} parent=1 // loop_pre_header
      _
    $region3: #{tpu_custom_call.1} parent=1 // loop_header
      %s16 = sphi 0, %s20
      %p17 = scmp.ge.s32.totalorder %s16, 4
      %s26 = sphi 0, %s28
      %s29 = sphi 0, %s26
      %s30 = sphi 0, %s29
      %s46 = sphi 0, %s30
      %s50 = sphi 0, %s50
      %s52 = sphi 0, %s50
      %s53 = sphi 0, %s52
      %s67 = sphi 0, %s53
      %s71 = sphi 0, %s71
      %s73 = sphi 0, %s71
      %s74 = sphi 0, %s73
      %s88 = sphi 0, %s74
      %s94 = sphi 0, %s96
      %s97 = sphi 0, %s94
      %s98 = sphi 0, %s97
      %s114 = sphi 0, %s98
    $region4: #{tpu_custom_call.1} parent=1 // loop_header_branch
      %19 = sbr.rel (%p17) target = $region8
    $region5: #{tpu_custom_call.1} parent=1 // loop_body
      %s21 = ssub.s32 %s16, 1
      %s22 = ssub.s32 %s16, 2
      %s23 = sadd.s32 %s16, 1
      %s24 = ssub.s32 %s16, %s23
      %p25 = scmp.eq.s32.totalorder %s24, 0
      %s27 = sadd.s32 %s26, 1
      %s28 = scalar_select %p25, %s26, %s27
      %p31 = pneg %p25
      %p32 = scmp.eq.s32.totalorder %s16, 1
      %p33 = por %p31, %p32
      %p34 = scmp.ne.s32.totalorder %s26, %s29
      %p35 = scmp.eq.s32.totalorder %s16, 0
      %p36 = por %p34, %p35
      %p37 = scmp.ne.s32.totalorder %s26, %s29
      %p38 = scmp.eq.s32.totalorder %s21, 1
      %p39 = por %p37, %p38
      %p40 = scmp.ne.s32.totalorder %s29, %s30
      %p41 = scmp.eq.s32.totalorder %s21, 0
      %p42 = por %p40, %p41
      %p43 = scmp.ne.s32.totalorder %s29, %s30
      %p44 = scmp.eq.s32.totalorder %s22, 1
      %p45 = por %p43, %p44
      %p47 = scmp.ne.s32.totalorder %s30, %s46
      %p48 = scmp.eq.s32.totalorder %s22, 0
      %p49 = por %p47, %p48
      %s51 = sadd.s32 %s50, 1
      %p54 = scmp.eq.s32.totalorder %s16, 1
      %p55 = scmp.ne.s32.totalorder %s50, %s52
      %p56 = scmp.eq.s32.totalorder %s16, 0
      %p57 = por %p55, %p56
      %p58 = scmp.ne.s32.totalorder %s50, %s52
      %p59 = scmp.eq.s32.totalorder %s21, 1
      %p60 = por %p58, %p59
      %p61 = scmp.ne.s32.totalorder %s52, %s53
      %p62 = scmp.eq.s32.totalorder %s21, 0
      %p63 = por %p61, %p62
      %p64 = scmp.ne.s32.totalorder %s52, %s53
      %p65 = scmp.eq.s32.totalorder %s22, 1
      %p66 = por %p64, %p65
      %p68 = scmp.ne.s32.totalorder %s53, %s67
      %p69 = scmp.eq.s32.totalorder %s22, 0
      %p70 = por %p68, %p69
      %s72 = sadd.s32 %s71, 1
      %p75 = scmp.eq.s32.totalorder %s16, 1
      %p76 = scmp.ne.s32.totalorder %s71, %s73
      %p77 = scmp.eq.s32.totalorder %s16, 0
      %p78 = por %p76, %p77
      %p79 = scmp.ne.s32.totalorder %s71, %s73
      %p80 = scmp.eq.s32.totalorder %s21, 1
      %p81 = por %p79, %p80
      %p82 = scmp.ne.s32.totalorder %s73, %s74
      %p83 = scmp.eq.s32.totalorder %s21, 0
      %p84 = por %p82, %p83
      %p85 = scmp.ne.s32.totalorder %s73, %s74
      %p86 = scmp.eq.s32.totalorder %s22, 1
      %p87 = por %p85, %p86
      %p89 = scmp.ne.s32.totalorder %s74, %s88
      %p90 = scmp.eq.s32.totalorder %s22, 0
      %p91 = por %p89, %p90
      %s92 = ssub.s32 %s16, %s23
      %p93 = scmp.eq.s32.totalorder %s92, 0
      %s95 = sadd.s32 %s94, 1
      %s96 = scalar_select %p93, %s94, %s95
      %p99 = pneg %p93
      %p100 = scmp.eq.s32.totalorder %s16, 1
      %p101 = por %p99, %p100
      %p102 = scmp.ne.s32.totalorder %s94, %s97
      %p103 = scmp.eq.s32.totalorder %s16, 0
      %p104 = por %p102, %p103
      %p105 = scmp.ne.s32.totalorder %s94, %s97
      %p106 = scmp.eq.s32.totalorder %s21, 1
      %p107 = por %p105, %p106
      %p108 = scmp.ne.s32.totalorder %s97, %s98
      %p109 = scmp.eq.s32.totalorder %s21, 0
      %p110 = por %p108, %p109
      %p111 = scmp.ne.s32.totalorder %s97, %s98
      %p112 = scmp.eq.s32.totalorder %s22, 1
      %p113 = por %p111, %p112
      %p115 = scmp.ne.s32.totalorder %s98, %s114
      %p116 = scmp.eq.s32.totalorder %s22, 0
      %p117 = por %p115, %p116
      %p118 = scmp.le.s32.totalorder 1, %s16
      %p119 = scmp.lt.s32.totalorder %s16, 3
      %p120 = pnand %p118, %p119
      %p121 = pneg %p120
      // Predicated region
      $region9: #{tpu_custom_call.1} parent=5 // pred_check
        _
      $region10: #{tpu_custom_call.1} parent=5 // pred_check_branch
        %123 = sbr.rel (%p120) target = $region12
      $region11: #{tpu_custom_call.1} parent=5 // pred_region
        %s124 = ssub.s32 %s16, 1
        // Predicated region
        $region13: #{tpu_custom_call.1} parent=11 // pred_check
          %p125 = pneg %p63
        $region14: #{tpu_custom_call.1} parent=11 // pred_check_branch
          %127 = sbr.rel (%p125) target = $region16
        $region15: #{tpu_custom_call.1} parent=11 // pred_region
          %s129 = ssub.s32 8192, 8192
          %130 = vsyncadd [#allocation6], %s129
          %s131 = sshll.u32 [#allocation5], 4
          %s132 = int_to_ptr.vmem [resolvable:$true] %s131
          %137 = dma.hbm_to_vmem [thread:$0]  %s1, 8192, %s132, [#allocation6], 128, 128, 8
        $region16: #{tpu_custom_call.1} parent=11 // pred_fallthru
          _
        // Predicated region
        $region17: #{tpu_custom_call.1} parent=11 // pred_check
          %p138 = pneg %p84
        $region18: #{tpu_custom_call.1} parent=11 // pred_check_branch
          %140 = sbr.rel (%p138) target = $region20
        $region19: #{tpu_custom_call.1} parent=11 // pred_region
          %s142 = ssub.s32 8192, 8192
          %143 = vsyncadd [#allocation6], %s142
          %s144 = sshll.u32 [#allocation7], 4
          %s145 = int_to_ptr.vmem [resolvable:$true] %s144
          %150 = dma.hbm_to_vmem [thread:$0]  %s2, 8192, %s145, [#allocation6], 128, 128, 8
        $region20: #{tpu_custom_call.1} parent=11 // pred_fallthru
          _
      $region12: #{tpu_custom_call.1} parent=5 // pred_fallthru
        _
      %p151 = scmp.lt.s32.totalorder %s16, 2
      // Predicated region
      $region21: #{tpu_custom_call.1} parent=5 // pred_check
        %p152 = pneg %p151
      $region22: #{tpu_custom_call.1} parent=5 // pred_check_branch
        %154 = sbr.rel (%p152) target = $region24
      $region23: #{tpu_custom_call.1} parent=5 // pred_region
        // Predicated region
        $region25: #{tpu_custom_call.1} parent=23 // pred_check
          %p155 = pneg %p36
        $region26: #{tpu_custom_call.1} parent=23 // pred_check_branch
          %157 = sbr.rel (%p155) target = $region28
        $region27: #{tpu_custom_call.1} parent=23 // pred_region
          %s158 = sand.u32 %s26, 1
          %s159 = scalar_lea.sflag [#allocation3], %s158
          %s160 = sand.u32 %s26, 1
          %s161 = smul.addr %s160, 24
          %s162 = scalar_lea.vmem [#allocation2], %s161
          %s163 = smul.u32 3, %s16
          %s165 = ssub.s32 384, 384
          %166 = vsyncadd %s159, %s165
          %s167 = smul.addr %s163, 128
          %s168 = scalar_lea.hbm %s0, %s167
          %s169 = sshll.u32 %s162, 4
          %s170 = int_to_ptr.vmem [resolvable:$true] %s169
          %175 = dma.hbm_to_vmem [thread:$0]  %s168, 384, %s170, %s159, 128, 128, 8
        $region28: #{tpu_custom_call.1} parent=23 // pred_fallthru
          _
      $region24: #{tpu_custom_call.1} parent=5 // pred_fallthru
        _
      %p176 = scmp.le.s32.totalorder 1, %s16
      %p177 = scmp.lt.s32.totalorder %s16, 3
      %p178 = pnand %p176, %p177
      %p179 = pneg %p178
      // Predicated region
      $region29: #{tpu_custom_call.1} parent=5 // pred_check
        _
      $region30: #{tpu_custom_call.1} parent=5 // pred_check_branch
        %181 = sbr.rel (%p178) target = $region32
      $region31: #{tpu_custom_call.1} parent=5 // pred_region
        %s182 = ssub.s32 %s16, 1
        %s183 = sand.u32 %s29, 1
        %s184 = scalar_lea.sflag [#allocation3], %s183
        %s185 = sand.u32 %s29, 1
        %s186 = smul.addr %s185, 24
        %s187 = scalar_lea.vmem [#allocation2], %s186
        // Predicated region
        $region33: #{tpu_custom_call.1} parent=31 // pred_check
          %p188 = pneg %p42
        $region34: #{tpu_custom_call.1} parent=31 // pred_check_branch
          %190 = sbr.rel (%p188) target = $region36
        $region35: #{tpu_custom_call.1} parent=31 // pred_region
          %191 = dma.done %s184, 384
        $region36: #{tpu_custom_call.1} parent=31 // pred_fallthru
          _
        // Predicated region
        $region37: #{tpu_custom_call.1} parent=31 // pred_check
          %p192 = pneg %p63
        $region38: #{tpu_custom_call.1} parent=31 // pred_check_branch
          %194 = sbr.rel (%p192) target = $region40
        $region39: #{tpu_custom_call.1} parent=31 // pred_region
          %195 = dma.done [#allocation6], 8192
        $region40: #{tpu_custom_call.1} parent=31 // pred_fallthru
          _
        // Predicated region
        $region41: #{tpu_custom_call.1} parent=31 // pred_check
          %p196 = pneg %p84
        $region42: #{tpu_custom_call.1} parent=31 // pred_check_branch
          %198 = sbr.rel (%p196) target = $region44
        $region43: #{tpu_custom_call.1} parent=31 // pred_region
          %199 = dma.done [#allocation6], 8192
        $region44: #{tpu_custom_call.1} parent=31 // pred_fallthru
          _
        %s200 = sand.u32 %s29, 1
        %s201 = scalar_lea.sflag [#allocation3], %s200
        %s202 = sand.u32 %s29, 1
        %s203 = smul.addr %s202, 24
        %s204 = scalar_lea.vmem [#allocation2], %s203
        %p205 = pneg %p42
        %p206 = pneg %p39
        %p207 = pneg %p63
        %p208 = pneg %p60
        %p209 = pneg %p84
        %p210 = pneg %p81
        %p211 = pneg %p110
        %p212 = pneg %p107
        %s213 = sand.u32 %s97, 1
        %s214 = scalar_lea.sflag [#allocation4], %s213
        %s215 = sand.u32 %s97, 1
        %s216 = smul.addr %s215, 24
        %s217 = scalar_lea.vmem [#allocation8], %s216
        %s218 = smul.u32 3, %s21
        %s219 = smul.u32 3, %s21
        %v220 = vld [vmem:[%s187] sm:$0xff]
        %v221 = vld [vmem:[%s187 + $0x8] sm:$0xff]
        %v222 = vld [vmem:[%s187 + $0x10] sm:$0xff]
        %v223 = vld [vmem:[#allocation5] sm:$0xff]
        %v224 = vld [vmem:[#allocation5 + $0x8] sm:$0xff]
        %v225 = vld [vmem:[#allocation5 + $0x10] sm:$0xff]
        %v226 = vld [vmem:[#allocation5 + $0x18] sm:$0xff]
        %v227 = vld [vmem:[#allocation5 + $0x20] sm:$0xff]
        %v228 = vld [vmem:[#allocation5 + $0x28] sm:$0xff]
        %v229 = vld [vmem:[#allocation5 + $0x30] sm:$0xff]
        %v230 = vld [vmem:[#allocation5 + $0x38] sm:$0xff]
        %v231 = vld [vmem:[#allocation5 + $0x40] sm:$0xff]
        %v232 = vld [vmem:[#allocation5 + $0x48] sm:$0xff]
        %v233 = vld [vmem:[#allocation5 + $0x50] sm:$0xff]
        %v234 = vld [vmem:[#allocation5 + $0x58] sm:$0xff]
        %v235 = vld [vmem:[#allocation5 + $0x60] sm:$0xff]
        %v236 = vld [vmem:[#allocation5 + $0x68] sm:$0xff]
        %v237 = vld [vmem:[#allocation5 + $0x70] sm:$0xff]
        %v238 = vld [vmem:[#allocation5 + $0x78] sm:$0xff]
        %v239 = vld [vmem:[#allocation5 + $0x80] sm:$0xff]
        %v240 = vld [vmem:[#allocation5 + $0x88] sm:$0xff]
        %v241 = vld [vmem:[#allocation5 + $0x90] sm:$0xff]
        %v242 = vld [vmem:[#allocation5 + $0x98] sm:$0xff]
        %v243 = vld [vmem:[#allocation5 + $0xa0] sm:$0xff]
        %v244 = vld [vmem:[#allocation5 + $0xa8] sm:$0xff]
        %v245 = vld [vmem:[#allocation5 + $0xb0] sm:$0xff]
        %v246 = vld [vmem:[#allocation5 + $0xb8] sm:$0xff]
        %v247 = vld [vmem:[#allocation5 + $0xc0] sm:$0xff]
        %v248 = vld [vmem:[#allocation5 + $0xc8] sm:$0xff]
        %v249 = vld [vmem:[#allocation5 + $0xd0] sm:$0xff]
        %v250 = vld [vmem:[#allocation5 + $0xd8] sm:$0xff]
        %v251 = vld [vmem:[#allocation5 + $0xe0] sm:$0xff]
        %v252 = vld [vmem:[#allocation5 + $0xe8] sm:$0xff]
        %v253 = vld [vmem:[#allocation5 + $0xf0] sm:$0xff]
        %v254 = vld [vmem:[#allocation5 + $0xf8] sm:$0xff]
        %v255 = vld [vmem:[#allocation5 + $0x100] sm:$0xff]
        %v256 = vld [vmem:[#allocation5 + $0x108] sm:$0xff]
        %v257 = vld [vmem:[#allocation5 + $0x110] sm:$0xff]
        %v258 = vld [vmem:[#allocation5 + $0x118] sm:$0xff]
        %v259 = vld [vmem:[#allocation5 + $0x120] sm:$0xff]
        %v260 = vld [vmem:[#allocation5 + $0x128] sm:$0xff]
        %v261 = vld [vmem:[#allocation5 + $0x130] sm:$0xff]
        %v262 = vld [vmem:[#allocation5 + $0x138] sm:$0xff]
        %v263 = vld [vmem:[#allocation5 + $0x140] sm:$0xff]
        %v264 = vld [vmem:[#allocation5 + $0x148] sm:$0xff]
        %v265 = vld [vmem:[#allocation5 + $0x150] sm:$0xff]
        %v266 = vld [vmem:[#allocation5 + $0x158] sm:$0xff]
        %v267 = vld [vmem:[#allocation5 + $0x160] sm:$0xff]
        %v268 = vld [vmem:[#allocation5 + $0x168] sm:$0xff]
        %v269 = vld [vmem:[#allocation5 + $0x170] sm:$0xff]
        %v270 = vld [vmem:[#allocation5 + $0x178] sm:$0xff]
        %v271 = vld [vmem:[#allocation5 + $0x180] sm:$0xff]
        %v272 = vld [vmem:[#allocation5 + $0x188] sm:$0xff]
        %v273 = vld [vmem:[#allocation5 + $0x190] sm:$0xff]
        %v274 = vld [vmem:[#allocation5 + $0x198] sm:$0xff]
        %v275 = vld [vmem:[#allocation5 + $0x1a0] sm:$0xff]
        %v276 = vld [vmem:[#allocation5 + $0x1a8] sm:$0xff]
        %v277 = vld [vmem:[#allocation5 + $0x1b0] sm:$0xff]
        %v278 = vld [vmem:[#allocation5 + $0x1b8] sm:$0xff]
        %v279 = vld [vmem:[#allocation5 + $0x1c0] sm:$0xff]
        %v280 = vld [vmem:[#allocation5 + $0x1c8] sm:$0xff]
        %v281 = vld [vmem:[#allocation5 + $0x1d0] sm:$0xff]
        %v282 = vld [vmem:[#allocation5 + $0x1d8] sm:$0xff]
        %v283 = vld [vmem:[#allocation5 + $0x1e0] sm:$0xff]
        %v284 = vld [vmem:[#allocation5 + $0x1e8] sm:$0xff]
        %v285 = vld [vmem:[#allocation5 + $0x1f0] sm:$0xff]
        %v286 = vld [vmem:[#allocation5 + $0x1f8] sm:$0xff]
        %v287 = vmul.f32 %v220, %v220
        %v288 = vmul.f32 %v221, %v221
        %v289 = vmul.f32 %v222, %v222
        %290 = vadd.xlane.f32.xlu0 %v287
        %v291 = vpop.xlane.xlu0 %290
        %292 = vadd.xlane.f32.xlu0 %v288
        %v293 = vpop.xlane.xlu0 %292
        %294 = vadd.xlane.f32.xlu0 %v289
        %v295 = vpop.xlane.xlu0 %294
        %v296 = vadd.f32 %v291, 1e-12
        %v297 = vadd.f32 %v293, 1e-12
        %v298 = vadd.f32 %v295, 1e-12
        %v299 = vrsqrt.pop %v296
        %v300 = vrsqrt.pop %v297
        %v301 = vrsqrt.pop %v298
        %v302 = vmul.f32 %v220, %v299
        %v303 = vmul.f32 %v221, %v300
        %v304 = vmul.f32 %v222, %v301
        %v305 = vmul.f32 %v302, 10.0
        %v306 = vmul.f32 %v303, 10.0
        %v307 = vmul.f32 %v304, 10.0
        %308 = vmatprep.subr.mxu0 0.0
        %309 = vmatpush1.xpose.msra.mxu0 %v223
        %310 = vmatprep.subr.mxu0 0.0
        %311 = vmatpush1.xpose.msra.mxu0 %v224
        %312 = vmatprep.subr.mxu0 0.0
        %313 = vmatpush1.xpose.msra.mxu0 %v225
        %314 = vmatprep.subr.mxu0 0.0
        %315 = vmatpush1.xpose.msra.mxu0 %v226
        %316 = vmatprep.subr.mxu0 0.0
        %317 = vmatpush1.xpose.msra.mxu0 %v227
        %318 = vmatprep.subr.mxu0 0.0
        %319 = vmatpush1.xpose.msra.mxu0 %v228
        %320 = vmatprep.subr.mxu0 0.0
        %321 = vmatpush1.xpose.msra.mxu0 %v229
        %322 = vmatprep.subr.mxu0 0.0
        %323 = vmatpush1.xpose.msra.mxu0 %v230
        %324 = vmatprep.subr.mxu0 0.0
        %325 = vmatpush1.xpose.msra.mxu0 %v231
        %326 = vmatprep.subr.mxu0 0.0
        %327 = vmatpush1.xpose.msra.mxu0 %v232
        %328 = vmatprep.subr.mxu0 0.0
        %329 = vmatpush1.xpose.msra.mxu0 %v233
        %330 = vmatprep.subr.mxu0 0.0
        %331 = vmatpush1.xpose.msra.mxu0 %v234
        %332 = vmatprep.subr.mxu0 0.0
        %333 = vmatpush1.xpose.msra.mxu0 %v235
        %334 = vmatprep.subr.mxu0 0.0
        %335 = vmatpush1.xpose.msra.mxu0 %v236
        %336 = vmatprep.subr.mxu0 0.0
        %337 = vmatpush1.xpose.msra.mxu0 %v237
        %338 = vmatprep.subr.mxu0 0.0
        %339 = vmatpush1.xpose.msra.mxu0 %v238
        %340 = vmatprep.subr.mxu0 0.0
        %341 = vmatpush1.xpose.msra.mxu0 %v239
        %342 = vmatprep.subr.mxu0 0.0
        %343 = vmatpush1.xpose.msra.mxu0 %v240
        %344 = vmatprep.subr.mxu0 0.0
        %345 = vmatpush1.xpose.msra.mxu0 %v241
        %346 = vmatprep.subr.mxu0 0.0
        %347 = vmatpush1.xpose.msra.mxu0 %v242
        %348 = vmatprep.subr.mxu0 0.0
        %349 = vmatpush1.xpose.msra.mxu0 %v243
        %350 = vmatprep.subr.mxu0 0.0
        %351 = vmatpush1.xpose.msra.mxu0 %v244
        %352 = vmatprep.subr.mxu0 0.0
        %353 = vmatpush1.xpose.msra.mxu0 %v245
        %354 = vmatprep.subr.mxu0 0.0
        %355 = vmatpush1.xpose.msra.mxu0 %v246
        %356 = vmatprep.subr.mxu0 0.0
        %357 = vmatpush1.xpose.msra.mxu0 %v247
        %358 = vmatprep.subr.mxu0 0.0
        %359 = vmatpush1.xpose.msra.mxu0 %v248
        %360 = vmatprep.subr.mxu0 0.0
        %361 = vmatpush1.xpose.msra.mxu0 %v249
        %362 = vmatprep.subr.mxu0 0.0
        %363 = vmatpush1.xpose.msra.mxu0 %v250
        %364 = vmatprep.subr.mxu0 0.0
        %365 = vmatpush1.xpose.msra.mxu0 %v251
        %366 = vmatprep.subr.mxu0 0.0
        %367 = vmatpush1.xpose.msra.mxu0 %v252
        %368 = vmatprep.subr.mxu0 0.0
        %369 = vmatpush1.xpose.msra.mxu0 %v253
        %370 = vmatprep.subr.mxu0 0.0
        %371 = vmatpush1.xpose.msra.mxu0 %v254
        %372 = vmatprep.mubr.f32.mxu0 0.0
        %373 = vmatmul.mubr.f32.gmra.mrb[0].mxu0 %v305
        %v374 = vpop.f32.mrb[0].mxu0
        %v375 = vadd.f32 0.0, %v374
        %v376 = vpop.f32.mrb[0].mxu0
        %v377 = vadd.f32 0.0, %v376
        %378 = vmatprep.mubr.f32.mxu0 0.0
        %379 = vmatmul.mubr.f32.gmra.mrb[0].mxu0 %v306
        %v380 = vpop.f32.mrb[0].mxu0
        %v381 = vadd.f32 0.0, %v380
        %v382 = vpop.f32.mrb[0].mxu0
        %v383 = vadd.f32 0.0, %v382
        %384 = vmatprep.mubr.f32.mxu0 0.0
        %385 = vmatmul.mubr.f32.gmra.mrb[0].mxu0 %v307
        %v386 = vpop.f32.mrb[0].mxu0
        %v387 = vadd.f32 0.0, %v386
        %v388 = vpop.f32.mrb[0].mxu0
        %v389 = vadd.f32 0.0, %v388
        %390 = vdwg.mxu0
        %391 = vmatprep.subr.mxu0 0.0
        %392 = vmatpush1.xpose.msra.mxu0 %v255
        %393 = vmatprep.subr.mxu0 0.0
        %394 = vmatpush1.xpose.msra.mxu0 %v256
        %395 = vmatprep.subr.mxu0 0.0
        %396 = vmatpush1.xpose.msra.mxu0 %v257
        %397 = vmatprep.subr.mxu0 0.0
        %398 = vmatpush1.xpose.msra.mxu0 %v258
        %399 = vmatprep.subr.mxu0 0.0
        %400 = vmatpush1.xpose.msra.mxu0 %v259
        %401 = vmatprep.subr.mxu0 0.0
        %402 = vmatpush1.xpose.msra.mxu0 %v260
        %403 = vmatprep.subr.mxu0 0.0
        %404 = vmatpush1.xpose.msra.mxu0 %v261
        %405 = vmatprep.subr.mxu0 0.0
        %406 = vmatpush1.xpose.msra.mxu0 %v262
        %407 = vmatprep.subr.mxu0 0.0
        %408 = vmatpush1.xpose.msra.mxu0 %v263
        %409 = vmatprep.subr.mxu0 0.0
        %410 = vmatpush1.xpose.msra.mxu0 %v264
        %411 = vmatprep.subr.mxu0 0.0
        %412 = vmatpush1.xpose.msra.mxu0 %v265
        %413 = vmatprep.subr.mxu0 0.0
        %414 = vmatpush1.xpose.msra.mxu0 %v266
        %415 = vmatprep.subr.mxu0 0.0
        %416 = vmatpush1.xpose.msra.mxu0 %v267
        %417 = vmatprep.subr.mxu0 0.0
        %418 = vmatpush1.xpose.msra.mxu0 %v268
        %419 = vmatprep.subr.mxu0 0.0
        %420 = vmatpush1.xpose.msra.mxu0 %v269
        %421 = vmatprep.subr.mxu0 0.0
        %422 = vmatpush1.xpose.msra.mxu0 %v270
        %423 = vmatprep.subr.mxu0 0.0
        %424 = vmatpush1.xpose.msra.mxu0 %v271
        %425 = vmatprep.subr.mxu0 0.0
        %426 = vmatpush1.xpose.msra.mxu0 %v272
        %427 = vmatprep.subr.mxu0 0.0
        %428 = vmatpush1.xpose.msra.mxu0 %v273
        %429 = vmatprep.subr.mxu0 0.0
        %430 = vmatpush1.xpose.msra.mxu0 %v274
        %431 = vmatprep.subr.mxu0 0.0
        %432 = vmatpush1.xpose.msra.mxu0 %v275
        %433 = vmatprep.subr.mxu0 0.0
        %434 = vmatpush1.xpose.msra.mxu0 %v276
        %435 = vmatprep.subr.mxu0 0.0
        %436 = vmatpush1.xpose.msra.mxu0 %v277
        %437 = vmatprep.subr.mxu0 0.0
        %438 = vmatpush1.xpose.msra.mxu0 %v278
        %439 = vmatprep.subr.mxu0 0.0
        %440 = vmatpush1.xpose.msra.mxu0 %v279
        %441 = vmatprep.subr.mxu0 0.0
        %442 = vmatpush1.xpose.msra.mxu0 %v280
        %443 = vmatprep.subr.mxu0 0.0
        %444 = vmatpush1.xpose.msra.mxu0 %v281
        %445 = vmatprep.subr.mxu0 0.0
        %446 = vmatpush1.xpose.msra.mxu0 %v282
        %447 = vmatprep.subr.mxu0 0.0
        %448 = vmatpush1.xpose.msra.mxu0 %v283
        %449 = vmatprep.subr.mxu0 0.0
        %450 = vmatpush1.xpose.msra.mxu0 %v284
        %451 = vmatprep.subr.mxu0 0.0
        %452 = vmatpush1.xpose.msra.mxu0 %v285
        %453 = vmatprep.subr.mxu0 0.0
        %454 = vmatpush1.xpose.msra.mxu0 %v286
        %455 = vmatprep.mubr.f32.mxu0 0.0
        %456 = vmatmul.mubr.f32.gmra.mrb[0].mxu0 %v305
        %v457 = vpop.f32.mrb[0].mxu0
        %v458 = vadd.f32 0.0, %v457
        %v459 = vpop.f32.mrb[0].mxu0
        %v460 = vadd.f32 0.0, %v459
        %461 = vmatprep.mubr.f32.mxu0 0.0
        %462 = vmatmul.mubr.f32.gmra.mrb[0].mxu0 %v306
        %v463 = vpop.f32.mrb[0].mxu0
        %v464 = vadd.f32 0.0, %v463
        %v465 = vpop.f32.mrb[0].mxu0
        %v466 = vadd.f32 0.0, %v465
        %467 = vmatprep.mubr.f32.mxu0 0.0
        %468 = vmatmul.mubr.f32.gmra.mrb[0].mxu0 %v307
        %v469 = vpop.f32.mrb[0].mxu0
        %v470 = vadd.f32 0.0, %v469
        %v471 = vpop.f32.mrb[0].mxu0
        %v472 = vadd.f32 0.0, %v471
        %473 = vdwg.mxu0
        %v474 = vmax.f32 %v375, %v458
        %v475 = vmax.f32 %v377, %v460
        %v476 = vmax.f32 %v474, %v475
        %477 = vmax.xlane.f32.xlu0 %v476
        %v478 = vpop.xlane.xlu0 %477
        %v479 = vmax.f32 %v381, %v464
        %v480 = vmax.f32 %v383, %v466
        %v481 = vmax.f32 %v479, %v480
        %482 = vmax.xlane.f32.xlu0 %v481
        %v483 = vpop.xlane.xlu0 %482
        %v484 = vmax.f32 %v387, %v470
        %v485 = vmax.f32 %v389, %v472
        %v486 = vmax.f32 %v484, %v485
        %487 = vmax.xlane.f32.xlu0 %v486
        %v488 = vpop.xlane.xlu0 %487
        %v489 = vsub.f32 %v375, %v478
        %v490 = vsub.f32 %v377, %v478
        %v491 = vsub.f32 %v458, %v478
        %v492 = vsub.f32 %v460, %v478
        %v493 = vsub.f32 %v381, %v483
        %v494 = vsub.f32 %v383, %v483
        %v495 = vsub.f32 %v464, %v483
        %v496 = vsub.f32 %v466, %v483
        %v497 = vsub.f32 %v387, %v488
        %v498 = vsub.f32 %v389, %v488
        %v499 = vsub.f32 %v470, %v488
        %v500 = vsub.f32 %v472, %v488
        %v501 = vmul.f32 %v489, 1.442695
        %v502 = vpow.pop %v501
        %v503 = vmul.f32 %v490, 1.442695
        %v504 = vpow.pop %v503
        %v505 = vmul.f32 %v491, 1.442695
        %v506 = vpow.pop %v505
        %v507 = vmul.f32 %v492, 1.442695
        %v508 = vpow.pop %v507
        %v509 = vmul.f32 %v493, 1.442695
        %v510 = vpow.pop %v509
        %v511 = vmul.f32 %v494, 1.442695
        %v512 = vpow.pop %v511
        %v513 = vmul.f32 %v495, 1.442695
        %v514 = vpow.pop %v513
        %v515 = vmul.f32 %v496, 1.442695
        %v516 = vpow.pop %v515
        %v517 = vmul.f32 %v497, 1.442695
        %v518 = vpow.pop %v517
        %v519 = vmul.f32 %v498, 1.442695
        %v520 = vpow.pop %v519
        %v521 = vmul.f32 %v499, 1.442695
        %v522 = vpow.pop %v521
        %v523 = vmul.f32 %v500, 1.442695
        %v524 = vpow.pop %v523
        %v525 = vld [vmem:[#allocation7] sm:$0xff]
        %v526 = vld [vmem:[#allocation7 + $0x8] sm:$0xff]
        %v527 = vld [vmem:[#allocation7 + $0x10] sm:$0xff]
        %v528 = vld [vmem:[#allocation7 + $0x18] sm:$0xff]
        %v529 = vld [vmem:[#allocation7 + $0x20] sm:$0xff]
        %v530 = vld [vmem:[#allocation7 + $0x28] sm:$0xff]
        %v531 = vld [vmem:[#allocation7 + $0x30] sm:$0xff]
        %v532 = vld [vmem:[#allocation7 + $0x38] sm:$0xff]
        %v533 = vld [vmem:[#allocation7 + $0x40] sm:$0xff]
        %v534 = vld [vmem:[#allocation7 + $0x48] sm:$0xff]
        %v535 = vld [vmem:[#allocation7 + $0x50] sm:$0xff]
        %v536 = vld [vmem:[#allocation7 + $0x58] sm:$0xff]
        %v537 = vld [vmem:[#allocation7 + $0x60] sm:$0xff]
        %v538 = vld [vmem:[#allocation7 + $0x68] sm:$0xff]
        %v539 = vld [vmem:[#allocation7 + $0x70] sm:$0xff]
        %v540 = vld [vmem:[#allocation7 + $0x78] sm:$0xff]
        %v541 = vld [vmem:[#allocation7 + $0x80] sm:$0xff]
        %v542 = vld [vmem:[#allocation7 + $0x88] sm:$0xff]
        %v543 = vld [vmem:[#allocation7 + $0x90] sm:$0xff]
        %v544 = vld [vmem:[#allocation7 + $0x98] sm:$0xff]
        %v545 = vld [vmem:[#allocation7 + $0xa0] sm:$0xff]
        %v546 = vld [vmem:[#allocation7 + $0xa8] sm:$0xff]
        %v547 = vld [vmem:[#allocation7 + $0xb0] sm:$0xff]
        %v548 = vld [vmem:[#allocation7 + $0xb8] sm:$0xff]
        %v549 = vld [vmem:[#allocation7 + $0xc0] sm:$0xff]
        %v550 = vld [vmem:[#allocation7 + $0xc8] sm:$0xff]
        %v551 = vld [vmem:[#allocation7 + $0xd0] sm:$0xff]
        %v552 = vld [vmem:[#allocation7 + $0xd8] sm:$0xff]
        %v553 = vld [vmem:[#allocation7 + $0xe0] sm:$0xff]
        %v554 = vld [vmem:[#allocation7 + $0xe8] sm:$0xff]
        %v555 = vld [vmem:[#allocation7 + $0xf0] sm:$0xff]
        %v556 = vld [vmem:[#allocation7 + $0xf8] sm:$0xff]
        %v557 = vld [vmem:[#allocation7 + $0x100] sm:$0xff]
        %v558 = vld [vmem:[#allocation7 + $0x108] sm:$0xff]
        %v559 = vld [vmem:[#allocation7 + $0x110] sm:$0xff]
        %v560 = vld [vmem:[#allocation7 + $0x118] sm:$0xff]
        %v561 = vld [vmem:[#allocation7 + $0x120] sm:$0xff]
        %v562 = vld [vmem:[#allocation7 + $0x128] sm:$0xff]
        %v563 = vld [vmem:[#allocation7 + $0x130] sm:$0xff]
        %v564 = vld [vmem:[#allocation7 + $0x138] sm:$0xff]
        %v565 = vld [vmem:[#allocation7 + $0x140] sm:$0xff]
        %v566 = vld [vmem:[#allocation7 + $0x148] sm:$0xff]
        %v567 = vld [vmem:[#allocation7 + $0x150] sm:$0xff]
        %v568 = vld [vmem:[#allocation7 + $0x158] sm:$0xff]
        %v569 = vld [vmem:[#allocation7 + $0x160] sm:$0xff]
        %v570 = vld [vmem:[#allocation7 + $0x168] sm:$0xff]
        %v571 = vld [vmem:[#allocation7 + $0x170] sm:$0xff]
        %v572 = vld [vmem:[#allocation7 + $0x178] sm:$0xff]
        %v573 = vld [vmem:[#allocation7 + $0x180] sm:$0xff]
        %v574 = vld [vmem:[#allocation7 + $0x188] sm:$0xff]
        %v575 = vld [vmem:[#allocation7 + $0x190] sm:$0xff]
        %v576 = vld [vmem:[#allocation7 + $0x198] sm:$0xff]
        %v577 = vld [vmem:[#allocation7 + $0x1a0] sm:$0xff]
        %v578 = vld [vmem:[#allocation7 + $0x1a8] sm:$0xff]
        %v579 = vld [vmem:[#allocation7 + $0x1b0] sm:$0xff]
        %v580 = vld [vmem:[#allocation7 + $0x1b8] sm:$0xff]
        %v581 = vld [vmem:[#allocation7 + $0x1c0] sm:$0xff]
        %v582 = vld [vmem:[#allocation7 + $0x1c8] sm:$0xff]
        %v583 = vld [vmem:[#allocation7 + $0x1d0] sm:$0xff]
        %v584 = vld [vmem:[#allocation7 + $0x1d8] sm:$0xff]
        %v585 = vld [vmem:[#allocation7 + $0x1e0] sm:$0xff]
        %v586 = vld [vmem:[#allocation7 + $0x1e8] sm:$0xff]
        %v587 = vld [vmem:[#allocation7 + $0x1f0] sm:$0xff]
        %v588 = vld [vmem:[#allocation7 + $0x1f8] sm:$0xff]
        %589 = vmatprep.subr.mxu0 0.0
        %590 = vmatpush1.msra.mxu0 %v525
        %591 = vmatprep.subr.mxu0 0.0
        %592 = vmatpush1.msra.mxu0 %v526
        %593 = vmatprep.subr.mxu0 0.0
        %594 = vmatpush1.msra.mxu0 %v527
        %595 = vmatprep.subr.mxu0 0.0
        %596 = vmatpush1.msra.mxu0 %v528
        %597 = vmatprep.subr.mxu0 0.0
        %598 = vmatpush1.msra.mxu0 %v529
        %599 = vmatprep.subr.mxu0 0.0
        %600 = vmatpush1.msra.mxu0 %v530
        %601 = vmatprep.subr.mxu0 0.0
        %602 = vmatpush1.msra.mxu0 %v531
        %603 = vmatprep.subr.mxu0 0.0
        %604 = vmatpush1.msra.mxu0 %v532
        %605 = vmatprep.subr.mxu0 0.0
        %606 = vmatpush1.msra.mxu0 %v533
        %607 = vmatprep.subr.mxu0 0.0
        %608 = vmatpush1.msra.mxu0 %v534
        %609 = vmatprep.subr.mxu0 0.0
        %610 = vmatpush1.msra.mxu0 %v535
        %611 = vmatprep.subr.mxu0 0.0
        %612 = vmatpush1.msra.mxu0 %v536
        %613 = vmatprep.subr.mxu0 0.0
        %614 = vmatpush1.msra.mxu0 %v537
        %615 = vmatprep.subr.mxu0 0.0
        %616 = vmatpush1.msra.mxu0 %v538
        %617 = vmatprep.subr.mxu0 0.0
        %618 = vmatpush1.msra.mxu0 %v539
        %619 = vmatprep.subr.mxu0 0.0
        %620 = vmatpush1.msra.mxu0 %v540
        %621 = vmatprep.subr.mxu0 0.0
        %622 = vmatpush1.msra.mxu0 %v541
        %623 = vmatprep.subr.mxu0 0.0
        %624 = vmatpush1.msra.mxu0 %v542
        %625 = vmatprep.subr.mxu0 0.0
        %626 = vmatpush1.msra.mxu0 %v543
        %627 = vmatprep.subr.mxu0 0.0
        %628 = vmatpush1.msra.mxu0 %v544
        %629 = vmatprep.subr.mxu0 0.0
        %630 = vmatpush1.msra.mxu0 %v545
        %631 = vmatprep.subr.mxu0 0.0
        %632 = vmatpush1.msra.mxu0 %v546
        %633 = vmatprep.subr.mxu0 0.0
        %634 = vmatpush1.msra.mxu0 %v547
        %635 = vmatprep.subr.mxu0 0.0
        %636 = vmatpush1.msra.mxu0 %v548
        %637 = vmatprep.subr.mxu0 0.0
        %638 = vmatpush1.msra.mxu0 %v549
        %639 = vmatprep.subr.mxu0 0.0
        %640 = vmatpush1.msra.mxu0 %v550
        %641 = vmatprep.subr.mxu0 0.0
        %642 = vmatpush1.msra.mxu0 %v551
        %643 = vmatprep.subr.mxu0 0.0
        %644 = vmatpush1.msra.mxu0 %v552
        %645 = vmatprep.subr.mxu0 0.0
        %646 = vmatpush1.msra.mxu0 %v553
        %647 = vmatprep.subr.mxu0 0.0
        %648 = vmatpush1.msra.mxu0 %v554
        %649 = vmatprep.subr.mxu0 0.0
        %650 = vmatpush1.msra.mxu0 %v555
        %651 = vmatprep.subr.mxu0 0.0
        %652 = vmatpush1.msra.mxu0 %v556
        %653 = vmatprep.mubr.f32.mxu0 %v504
        %654 = vmatmul.mubr.f32.gmra.mrb[0].mxu0 %v502
        %v655 = vpop.f32.mrb[0].mxu0
        %v656 = vadd.f32 0.0, %v655
        %v657 = vpop.f32.mrb[0].mxu0
        %658 = vmatprep.mubr.f32.mxu0 %v512
        %659 = vmatmul.mubr.f32.gmra.mrb[0].mxu0 %v510
        %v660 = vpop.f32.mrb[0].mxu0
        %v661 = vadd.f32 0.0, %v660
        %v662 = vpop.f32.mrb[0].mxu0
        %663 = vmatprep.mubr.f32.mxu0 %v520
        %664 = vmatmul.mubr.f32.gmra.mrb[0].mxu0 %v518
        %v665 = vpop.f32.mrb[0].mxu0
        %v666 = vadd.f32 0.0, %v665
        %v667 = vpop.f32.mrb[0].mxu0
        %668 = vdwg.mxu0
        %669 = vmatprep.subr.mxu0 0.0
        %670 = vmatpush1.msra.mxu0 %v557
        %671 = vmatprep.subr.mxu0 0.0
        %672 = vmatpush1.msra.mxu0 %v558
        %673 = vmatprep.subr.mxu0 0.0
        %674 = vmatpush1.msra.mxu0 %v559
        %675 = vmatprep.subr.mxu0 0.0
        %676 = vmatpush1.msra.mxu0 %v560
        %677 = vmatprep.subr.mxu0 0.0
        %678 = vmatpush1.msra.mxu0 %v561
        %679 = vmatprep.subr.mxu0 0.0
        %680 = vmatpush1.msra.mxu0 %v562
        %681 = vmatprep.subr.mxu0 0.0
        %682 = vmatpush1.msra.mxu0 %v563
        %683 = vmatprep.subr.mxu0 0.0
        %684 = vmatpush1.msra.mxu0 %v564
        %685 = vmatprep.subr.mxu0 0.0
        %686 = vmatpush1.msra.mxu0 %v565
        %687 = vmatprep.subr.mxu0 0.0
        %688 = vmatpush1.msra.mxu0 %v566
        %689 = vmatprep.subr.mxu0 0.0
        %690 = vmatpush1.msra.mxu0 %v567
        %691 = vmatprep.subr.mxu0 0.0
        %692 = vmatpush1.msra.mxu0 %v568
        %693 = vmatprep.subr.mxu0 0.0
        %694 = vmatpush1.msra.mxu0 %v569
        %695 = vmatprep.subr.mxu0 0.0
        %696 = vmatpush1.msra.mxu0 %v570
        %697 = vmatprep.subr.mxu0 0.0
        %698 = vmatpush1.msra.mxu0 %v571
        %699 = vmatprep.subr.mxu0 0.0
        %700 = vmatpush1.msra.mxu0 %v572
        %701 = vmatprep.subr.mxu0 0.0
        %702 = vmatpush1.msra.mxu0 %v573
        %703 = vmatprep.subr.mxu0 0.0
        %704 = vmatpush1.msra.mxu0 %v574
        %705 = vmatprep.subr.mxu0 0.0
        %706 = vmatpush1.msra.mxu0 %v575
        %707 = vmatprep.subr.mxu0 0.0
        %708 = vmatpush1.msra.mxu0 %v576
        %709 = vmatprep.subr.mxu0 0.0
        %710 = vmatpush1.msra.mxu0 %v577
        %711 = vmatprep.subr.mxu0 0.0
        %712 = vmatpush1.msra.mxu0 %v578
        %713 = vmatprep.subr.mxu0 0.0
        %714 = vmatpush1.msra.mxu0 %v579
        %715 = vmatprep.subr.mxu0 0.0
        %716 = vmatpush1.msra.mxu0 %v580
        %717 = vmatprep.subr.mxu0 0.0
        %718 = vmatpush1.msra.mxu0 %v581
        %719 = vmatprep.subr.mxu0 0.0
        %720 = vmatpush1.msra.mxu0 %v582
        %721 = vmatprep.subr.mxu0 0.0
        %722 = vmatpush1.msra.mxu0 %v583
        %723 = vmatprep.subr.mxu0 0.0
        %724 = vmatpush1.msra.mxu0 %v584
        %725 = vmatprep.subr.mxu0 0.0
        %726 = vmatpush1.msra.mxu0 %v585
        %727 = vmatprep.subr.mxu0 0.0
        %728 = vmatpush1.msra.mxu0 %v586
        %729 = vmatprep.subr.mxu0 0.0
        %730 = vmatpush1.msra.mxu0 %v587
        %731 = vmatprep.subr.mxu0 0.0
        %732 = vmatpush1.msra.mxu0 %v588
        %733 = vmatprep.mubr.f32.mxu0 %v508
        %734 = vmatmul.mubr.f32.gmra.mrb[0].mxu0 %v506
        %v735 = vpop.f32.mrb[0].mxu0
        %v736 = vadd.f32 %v656, %v735
        %v737 = vpop.f32.mrb[0].mxu0
        %738 = vmatprep.mubr.f32.mxu0 %v516
        %739 = vmatmul.mubr.f32.gmra.mrb[0].mxu0 %v514
        %v740 = vpop.f32.mrb[0].mxu0
        %v741 = vadd.f32 %v661, %v740
        %v742 = vpop.f32.mrb[0].mxu0
        %743 = vmatprep.mubr.f32.mxu0 %v524
        %744 = vmatmul.mubr.f32.gmra.mrb[0].mxu0 %v522
        %v745 = vpop.f32.mrb[0].mxu0
        %v746 = vadd.f32 %v666, %v745
        %v747 = vpop.f32.mrb[0].mxu0
        %748 = vdwg.mxu0
        %v749 = vmul.f32 %v736, %v736
        %v750 = vmul.f32 %v741, %v741
        %v751 = vmul.f32 %v746, %v746
        %752 = vadd.xlane.f32.xlu0 %v749
        %v753 = vpop.xlane.xlu0 %752
        %754 = vadd.xlane.f32.xlu0 %v750
        %v755 = vpop.xlane.xlu0 %754
        %756 = vadd.xlane.f32.xlu0 %v751
        %v757 = vpop.xlane.xlu0 %756
        %v758 = vadd.f32 %v753, 1e-12
        %v759 = vadd.f32 %v755, 1e-12
        %v760 = vadd.f32 %v757, 1e-12
        %v761 = vrsqrt.pop %v758
        %v762 = vrsqrt.pop %v759
        %v763 = vrsqrt.pop %v760
        %v764 = vmul.f32 %v736, %v761
        %v765 = vmul.f32 %v741, %v762
        %v766 = vmul.f32 %v746, %v763
        %v767 = vmul.f32 %v302, 0.7
        %v768 = vmul.f32 %v303, 0.7
        %v769 = vmul.f32 %v304, 0.7
        %v770 = vmul.f32 %v764, 0.3
        %v771 = vmul.f32 %v765, 0.3
        %v772 = vmul.f32 %v766, 0.3
        %v773 = vadd.f32 %v767, %v770
        %v774 = vadd.f32 %v768, %v771
        %v775 = vadd.f32 %v769, %v772
        %v776 = vmul.f32 %v773, %v773
        %v777 = vmul.f32 %v774, %v774
        %v778 = vmul.f32 %v775, %v775
        %779 = vadd.xlane.f32.xlu0 %v776
        %v780 = vpop.xlane.xlu0 %779
        %781 = vadd.xlane.f32.xlu0 %v777
        %v782 = vpop.xlane.xlu0 %781
        %783 = vadd.xlane.f32.xlu0 %v778
        %v784 = vpop.xlane.xlu0 %783
        %v785 = vadd.f32 %v780, 1e-12
        %v786 = vadd.f32 %v782, 1e-12
        %v787 = vadd.f32 %v784, 1e-12
        %v788 = vrsqrt.pop %v785
        %v789 = vrsqrt.pop %v786
        %v790 = vrsqrt.pop %v787
        %v791 = vmul.f32 %v773, %v788
        %v792 = vmul.f32 %v774, %v789
        %v793 = vmul.f32 %v775, %v790
        %794 = vst [vmem:[%s217] sm:$0xff] %v791
        %795 = vst [vmem:[%s217 + $0x8] sm:$0xff] %v792
        %796 = vst [vmem:[%s217 + $0x10] sm:$0xff] %v793
        %s797 = sand.u32 %s97, 1
        %s798 = scalar_lea.sflag [#allocation4], %s797
        %s799 = sand.u32 %s97, 1
        %s800 = smul.addr %s799, 24
        %s801 = scalar_lea.vmem [#allocation8], %s800
        // Predicated region
        $region45: #{tpu_custom_call.1} parent=31 // pred_check
          %p802 = pneg %p107
        $region46: #{tpu_custom_call.1} parent=31 // pred_check_branch
          %804 = sbr.rel (%p802) target = $region48
        $region47: #{tpu_custom_call.1} parent=31 // pred_region
          %s805 = smul.u32 3, %s21
          %s807 = ssub.s32 384, 384
          %808 = vsyncadd %s798, %s807
          %s809 = smul.addr %s805, 128
          %s810 = scalar_lea.hbm %s3, %s809
          %s811 = sshll.u32 %s801, 4
          %s812 = int_to_ptr.vmem [resolvable:$true] %s811
          %817 = dma.vmem_to_hbm [thread:$0]  %s812, 384, %s810, %s798, 128, 128, 8
        $region48: #{tpu_custom_call.1} parent=31 // pred_fallthru
          _
      $region32: #{tpu_custom_call.1} parent=5 // pred_fallthru
        _
      %p818 = scmp.le.s32.totalorder 2, %s16
      // Predicated region
      $region49: #{tpu_custom_call.1} parent=5 // pred_check
        %p819 = pneg %p818
      $region50: #{tpu_custom_call.1} parent=5 // pred_check_branch
        %821 = sbr.rel (%p819) target = $region52
      $region51: #{tpu_custom_call.1} parent=5 // pred_region
        %s822 = ssub.s32 %s16, 2
        // Predicated region
        $region53: #{tpu_custom_call.1} parent=51 // pred_check
          %p823 = pneg %p113
        $region54: #{tpu_custom_call.1} parent=51 // pred_check_branch
          %825 = sbr.rel (%p823) target = $region56
        $region55: #{tpu_custom_call.1} parent=51 // pred_region
          %s826 = sand.u32 %s98, 1
          %s827 = scalar_lea.sflag [#allocation4], %s826
          %s828 = sand.u32 %s98, 1
          %s829 = smul.addr %s828, 24
          %s830 = scalar_lea.vmem [#allocation8], %s829
          %831 = dma.done %s827, 384
        $region56: #{tpu_custom_call.1} parent=51 // pred_fallthru
          _
      $region52: #{tpu_custom_call.1} parent=5 // pred_fallthru
        _
    $region6: #{tpu_custom_call.1} parent=1 // loop_footer
      %s20 = sadd.s32 1, %s16
    $region7: #{tpu_custom_call.1} parent=1 // loop_footer_branch
      %15 = sbr.rel target = $region3
    $region8: #{tpu_custom_call.1} parent=1 // loop_exit
      _
    %832 = vsyncpa [#allocation3], 1
    %s833 = scalar_lea.sflag [#allocation3], 1
    %834 = vsyncpa %s833, 1
    %835 = vsyncpa [#allocation6], 1
    %836 = vsyncpa [#allocation4], 1
    %s837 = scalar_lea.sflag [#allocation4], 1
    %838 = vsyncpa %s837, 1

</llo_original>
